<compile_context>
chip_gen: v6e
topology: v6e:2x2x1
jax: 0.10.0
libtpu: 0.0.40
codegen_flags: <defaults>
</compile_context>

<pallas_src>
import jax
import jax.numpy as jnp
from jax.experimental import pallas as pl
from jax.experimental.pallas import tpu as pltpu


# ------------------------------ fused kernel -------------------------------

def _lpnarrow_fused_kernel(idx_ref,    # (B, 3)  int32   decoder indices
                           e_ref,      # (n, emb)        node embeddings
                           rel_ref,    # (r_pad, emb)    relation embeddings
                           a_hor_ref,  # (n, R*n)        horizontally stacked adj (r-major)
                           th_w_ref,   # (emb, hidden)
                           th_b_ref,   # (1, hidden)
                           wcat_ref,   # (depth, hidden, R*hidden)  W_cat per layer
                           lb_ref,     # (depth, 1, hidden)
                           fr_w_ref,   # (hidden, emb)
                           fr_b_ref,   # (1, emb)
                           out_ref,    # (B, 1)          raw distmult scores
                           k_sc):      # VMEM (R*n, hidden) staged H@W_r, r-major
    n = e_ref.shape[0]
    depth = lb_ref.shape[0]
    hidden = th_w_ref.shape[1]
    R = wcat_ref.shape[2] // hidden
    B = out_ref.shape[0]
    r_pad = rel_ref.shape[0]

    e = e_ref[...]

    # ---- tohidden: (n, emb) @ (emb, hidden) + b ----
    h = jnp.dot(e, th_w_ref[...], preferred_element_type=jnp.float32) + th_b_ref[...]

    # ---- depth x RGCN layer (vertical / hor=False):  H <- sum_r A_r@(H@W_r) + b
    # One fat matmul per layer computes all R projections at once:
    #   k2[j, r*h + o] = (H @ W_r)[j, o]
    # then the r-major restaging into k_sc is just R slice copies (no MXU), and
    # the relation sum is one matmul against the r-major stacked adjacency.
    for d in range(depth):
        k2 = jnp.dot(h, wcat_ref[d], preferred_element_type=jnp.float32)  # (n, R*h)
        for r in range(R):
            k_sc[pl.ds(r * n, n), :] = k2[:, r * hidden:(r + 1) * hidden]
        h = (jnp.dot(a_hor_ref[...], k_sc[...],
                     preferred_element_type=jnp.float32)
             + lb_ref[d])

    # ---- distmult decoder: one-hot matmul gathers (MXU), no serial scalar loop
    idx = idx_ref[...]                              # (B, 3) int32
    s_col = idx[:, 0:1]
    p_col = idx[:, 1:2]
    o_col = idx[:, 2:3]
    iota_n = jax.lax.broadcasted_iota(jnp.int32, (B, n), 1)
    iota_r = jax.lax.broadcasted_iota(jnp.int32, (B, r_pad), 1)
    oh_s = jnp.where(iota_n == s_col, 1.0, 0.0)     # (B, n)
    oh_o = jnp.where(iota_n == o_col, 1.0, 0.0)     # (B, n)
    oh_p = jnp.where(iota_r == p_col, 1.0, 0.0)     # (B, r_pad)

    # ---- frhidden + residual only for the gathered batch rows (2B rows) ----
    s_h = jnp.dot(oh_s, h, preferred_element_type=jnp.float32)          # (B, hidden)
    o_h = jnp.dot(oh_o, h, preferred_element_type=jnp.float32)
    s_e = jnp.dot(oh_s, e, preferred_element_type=jnp.float32)          # (B, emb)
    o_e = jnp.dot(oh_o, e, preferred_element_type=jnp.float32)
    p_emb = jnp.dot(oh_p, rel_ref[...], preferred_element_type=jnp.float32)

    fr_w = fr_w_ref[...]
    fr_b = fr_b_ref[...]
    s_emb = s_e + jnp.dot(s_h, fr_w, preferred_element_type=jnp.float32) + fr_b
    o_emb = o_e + jnp.dot(o_h, fr_w, preferred_element_type=jnp.float32) + fr_b

    prod = s_emb * p_emb * o_emb                    # (B, emb)
    out_ref[...] = jnp.sum(prod, axis=1, keepdims=True)


# ----------------------- one-off packing (hoisted) --------------------------

def prepare_lpnarrow(params, A):
    """Pack params + dense adjacency into kernel-ready arrays.  Done once,
    alongside the parameters, so the per-call forward path does no packing."""
    E = params['embeddings']
    n, emb = E.shape
    hidden = params['tohidden_w'].shape[1]
    depth = len(params['layers'])
    R = A.shape[0]

    # A_hor[s, r*n + j] = A[r, s, j]   (r-major horizontally stacked adjacency)
    a_hor = jnp.transpose(A, (1, 0, 2)).reshape(n, R * n)

    # W_cat[d][i, r*h + o] = W_d[r, i, o]   (all relations of a layer, side by side)
    wcat = jnp.stack(
        [jnp.transpose(W, (1, 0, 2)).reshape(hidden, R * hidden)
         for (W, _) in params['layers']], axis=0)                # (depth, h, R*h)
    lb = jnp.stack([b for (_, b) in params['layers']],
                   axis=0).reshape(depth, 1, hidden)             # (depth, 1, h)

    # Pad relation rows to a sublane multiple; padded rows are never selected
    # by the one-hot gather (p < r).
    rel = params['relations']
    r_rows = rel.shape[0]
    r_pad = ((r_rows + 7) // 8) * 8
    if r_pad != r_rows:
        rel = jnp.pad(rel, ((0, r_pad - r_rows), (0, 0)))

    return dict(
        E=E, rel=rel, a_hor=a_hor,
        th_w=params['tohidden_w'], th_b=params['tohidden_b'].reshape(1, hidden),
        wcat=wcat, lb=lb,
        fr_w=params['frhidden_w'], fr_b=params['frhidden_b'].reshape(1, emb),
        n=n, emb=emb, hidden=hidden, depth=depth, R=R)


# ------------------------------- forward ------------------------------------

def lpnarrow_forward(prep, batch):
    dims = batch.shape[:-1]
    flat = batch.reshape(-1, 3).astype(jnp.int32)
    B = flat.shape[0]
    B_pad = ((B + 7) // 8) * 8
    if B_pad != B:
        flat = jnp.pad(flat, ((0, B_pad - B), (0, 0)))   # dummy rows read index 0

    n, hidden, R = prep['n'], prep['hidden'], prep['R']

    def vmem():
        return pl.BlockSpec(memory_space=pltpu.MemorySpace.VMEM)

    out = pl.pallas_call(
        _lpnarrow_fused_kernel,
        out_shape=jax.ShapeDtypeStruct((B_pad, 1), jnp.float32),
        in_specs=[vmem() for _ in range(10)],
        out_specs=vmem(),
        scratch_shapes=[pltpu.VMEM((R * n, hidden), jnp.float32)],
    )(flat, prep['E'], prep['rel'], prep['a_hor'],
      prep['th_w'], prep['th_b'], prep['wcat'], prep['lb'],
      prep['fr_w'], prep['fr_b'])

    return out[:B, 0].reshape(dims)


# ------------------------------- glue (JAX) ---------------------------------

def add_inverse_and_self(triples, n, r):
    inv = jnp.stack([triples[:, 2], triples[:, 1] + r, triples[:, 0]], axis=1)
    all_n = jnp.arange(n, dtype=triples.dtype)
    slf = jnp.stack(
        [all_n, jnp.full((n,), 2 * r, dtype=triples.dtype), all_n], axis=1)
    return jnp.concatenate([triples, slf, inv], axis=0)


def build_dense_adj(triples_aug, n, R):
    # TODO(synk): sparse adjacency construction + row normalization is a
    # scatter-add over the triple list; done in XLA glue, not a Pallas kernel.
    s, p, o = triples_aug[:, 0], triples_aug[:, 1], triples_aug[:, 2]
    A = jnp.zeros((R, n, n), jnp.float32).at[p, s, o].add(1.0)
    rowsum = A.sum(axis=-1, keepdims=True)
    return A / jnp.where(rowsum == 0, 1.0, rowsum)


def reference_forward(params, A, batch):
    dims = batch.shape[:-1]
    flat = batch.reshape(-1, 3)
    E = params['embeddings']
    H = E @ params['tohidden_w'] + params['tohidden_b']
    for W, b in params['layers']:
        M = jnp.einsum('rso,oh->rsh', A, H)          # A_r @ H per relation
        H = jnp.einsum('rio,rni->no', W, M) + b      # mix over relations
    emb = E + H @ params['frhidden_w'] + params['frhidden_b']
    s = emb[flat[:, 0]]
    p = params['relations'][flat[:, 1]]
    o = emb[flat[:, 2]]
    return (s * p * o).sum(-1).reshape(dims)


# --------------------------------- main --------------------------------------

if __name__ == "__main__":
    key = jax.random.PRNGKey(0)
    n, r, emb, hidden, depth = 16, 3, 128, 16, 2
    R = 2 * r + 1
    num_triples = 20

    ks = jax.random.split(key, 12)
    s_idx = jax.random.randint(ks[0], (num_triples,), 0, n)
    p_idx = jax.random.randint(ks[1], (num_triples,), 0, r)
    o_idx = jax.random.randint(ks[2], (num_triples,), 0, n)
    triples = jnp.stack([s_idx, p_idx, o_idx], axis=1).astype(jnp.int32)

    aug = add_inverse_and_self(triples, n, r)
    A = build_dense_adj(aug, n, R)

    init = 0.85
    params = {
        'embeddings': jax.random.uniform(ks[3], (n, emb), jnp.float32,
                                         -init, init),
        'relations': jax.random.uniform(ks[4], (r, emb), jnp.float32,
                                        -init, init),
        'tohidden_w': jax.random.normal(ks[5], (emb, hidden),
                                        jnp.float32) * 0.05,
        'tohidden_b': jnp.zeros((hidden,), jnp.float32),
        'frhidden_w': jax.random.normal(ks[6], (hidden, emb),
                                        jnp.float32) * 0.05,
        'frhidden_b': jnp.zeros((emb,), jnp.float32),
        'layers': [],
    }
    lkeys = jax.random.split(ks[7], depth)
    for d in range(depth):
        W = jax.random.normal(lkeys[d], (R, hidden, hidden),
                              jnp.float32) * (1.0 / hidden ** 0.5)
        b = jnp.zeros((hidden,), jnp.float32)
        params['layers'].append((W, b))

    # batch of triples with leading dims (2, 4)
    batch = jnp.stack([
        jax.random.randint(ks[8], (2, 4), 0, n),
        jax.random.randint(ks[9], (2, 4), 0, r),
        jax.random.randint(ks[10], (2, 4), 0, n),
    ], axis=-1).astype(jnp.int32)

    prep = prepare_lpnarrow(params, A)           # one-off packing, hoisted
    out = lpnarrow_forward(prep, batch)
    out = jax.block_until_ready(out)

    ref = reference_forward(params, A, batch)
    assert out.shape == batch.shape[:-1]
    assert jnp.allclose(out, ref, rtol=1e-4, atol=1e-4), (out, ref)
    print("KERNEL_OK")
</pallas_src>

<mosaic_0001>
module attributes {stable_mosaic.version = 11 : i64} {
  func.func @_lpnarrow_fused_kernel(%arg0: memref<8x3xi32, #tpu.memory_space<vmem>>, %arg1: memref<16x128xf32, #tpu.memory_space<vmem>>, %arg2: memref<8x128xf32, #tpu.memory_space<vmem>>, %arg3: memref<16x112xf32, #tpu.memory_space<vmem>>, %arg4: memref<128x16xf32, #tpu.memory_space<vmem>>, %arg5: memref<1x16xf32, #tpu.memory_space<vmem>>, %arg6: memref<2x16x112xf32, #tpu.memory_space<vmem>>, %arg7: memref<2x1x16xf32, #tpu.memory_space<vmem>>, %arg8: memref<16x128xf32, #tpu.memory_space<vmem>>, %arg9: memref<1x128xf32, #tpu.memory_space<vmem>>, %arg10: memref<8x1xf32, #tpu.memory_space<vmem>>, %arg11: memref<112x16xf32, #tpu.memory_space<vmem>>) attributes {dimension_semantics = [], scalar_prefetch = 0 : i64, scratch_operands = 1 : i64, tpu.core_type = #tpu.core_type<tc>} {
    %c0 = arith.constant 0 : index
    %c0_0 = arith.constant 0 : index
    %0 = vector.load %arg1[%c0, %c0_0] : memref<16x128xf32, #tpu.memory_space<vmem>>, vector<16x128xf32>
    %c0_1 = arith.constant 0 : index
    %c0_2 = arith.constant 0 : index
    %1 = vector.load %arg4[%c0_1, %c0_2] : memref<128x16xf32, #tpu.memory_space<vmem>>, vector<128x16xf32>
    %cst = arith.constant dense<0.000000e+00> : vector<16x16xf32>
    %2 = tpu.matmul %0, %1, %cst {dimension_numbers = #tpu.dot_dimension_numbers<[1], [0], [0], [1], [0, 0, 1, 1], [], []>} : vector<16x128xf32>, vector<128x16xf32>, vector<16x16xf32> -> vector<16x16xf32>
    %c0_3 = arith.constant 0 : index
    %c0_4 = arith.constant 0 : index
    %3 = vector.load %arg5[%c0_3, %c0_4] : memref<1x16xf32, #tpu.memory_space<vmem>>, vector<1x16xf32>
    %4 = vector.broadcast %3 : vector<1x16xf32> to vector<16x16xf32>
    %5 = arith.addf %2, %4 : vector<16x16xf32>
    %c0_5 = arith.constant 0 : index
    %c0_6 = arith.constant 0 : index
    %c0_7 = arith.constant 0 : index
    %6 = vector.load %arg6[%c0_5, %c0_6, %c0_7] : memref<2x16x112xf32, #tpu.memory_space<vmem>>, vector<1x16x112xf32>
    %7 = vector.shape_cast %6 : vector<1x16x112xf32> to vector<16x112xf32>
    %cst_8 = arith.constant dense<0.000000e+00> : vector<16x112xf32>
    %8 = tpu.matmul %5, %7, %cst_8 {dimension_numbers = #tpu.dot_dimension_numbers<[1], [0], [0], [1], [0, 0, 1, 1], [], []>} : vector<16x16xf32>, vector<16x112xf32>, vector<16x112xf32> -> vector<16x112xf32>
    %9 = vector.extract_strided_slice %8 {offsets = [0, 0], sizes = [16, 16], strides = [1, 1]} : vector<16x112xf32> to vector<16x16xf32>
    %c0_9 = arith.constant 0 : index
    %c0_10 = arith.constant 0 : index
    %10 = vector.load %arg11[%c0_9, %c0_10] : memref<112x16xf32, #tpu.memory_space<vmem>>, vector<16x16xf32>
    tpu.vector_store %arg11[%c0_9, %c0_10], %9 {strides = array<i32>} : memref<112x16xf32, #tpu.memory_space<vmem>>, vector<16x16xf32>,
    %11 = vector.extract_strided_slice %8 {offsets = [0, 16], sizes = [16, 16], strides = [1, 1]} : vector<16x112xf32> to vector<16x16xf32>
    %c16 = arith.constant 16 : index
    %c0_11 = arith.constant 0 : index
    %12 = vector.load %arg11[%c16, %c0_11] : memref<112x16xf32, #tpu.memory_space<vmem>>, vector<16x16xf32>
    tpu.vector_store %arg11[%c16, %c0_11], %11 {strides = array<i32>} : memref<112x16xf32, #tpu.memory_space<vmem>>, vector<16x16xf32>,
    %13 = vector.extract_strided_slice %8 {offsets = [0, 32], sizes = [16, 16], strides = [1, 1]} : vector<16x112xf32> to vector<16x16xf32>
    %c32 = arith.constant 32 : index
    %c0_12 = arith.constant 0 : index
    %14 = vector.load %arg11[%c32, %c0_12] : memref<112x16xf32, #tpu.memory_space<vmem>>, vector<16x16xf32>
    tpu.vector_store %arg11[%c32, %c0_12], %13 {strides = array<i32>} : memref<112x16xf32, #tpu.memory_space<vmem>>, vector<16x16xf32>,
    %15 = vector.extract_strided_slice %8 {offsets = [0, 48], sizes = [16, 16], strides = [1, 1]} : vector<16x112xf32> to vector<16x16xf32>
    %c48 = arith.constant 48 : index
    %c0_13 = arith.constant 0 : index
    %16 = vector.load %arg11[%c48, %c0_13] : memref<112x16xf32, #tpu.memory_space<vmem>>, vector<16x16xf32>
    tpu.vector_store %arg11[%c48, %c0_13], %15 {strides = array<i32>} : memref<112x16xf32, #tpu.memory_space<vmem>>, vector<16x16xf32>,
    %17 = vector.extract_strided_slice %8 {offsets = [0, 64], sizes = [16, 16], strides = [1, 1]} : vector<16x112xf32> to vector<16x16xf32>
    %c64 = arith.constant 64 : index
    %c0_14 = arith.constant 0 : index
    %18 = vector.load %arg11[%c64, %c0_14] : memref<112x16xf32, #tpu.memory_space<vmem>>, vector<16x16xf32>
    tpu.vector_store %arg11[%c64, %c0_14], %17 {strides = array<i32>} : memref<112x16xf32, #tpu.memory_space<vmem>>, vector<16x16xf32>,
    %19 = vector.extract_strided_slice %8 {offsets = [0, 80], sizes = [16, 16], strides = [1, 1]} : vector<16x112xf32> to vector<16x16xf32>
    %c80 = arith.constant 80 : index
    %c0_15 = arith.constant 0 : index
    %20 = vector.load %arg11[%c80, %c0_15] : memref<112x16xf32, #tpu.memory_space<vmem>>, vector<16x16xf32>
    tpu.vector_store %arg11[%c80, %c0_15], %19 {strides = array<i32>} : memref<112x16xf32, #tpu.memory_space<vmem>>, vector<16x16xf32>,
    %21 = vector.extract_strided_slice %8 {offsets = [0, 96], sizes = [16, 16], strides = [1, 1]} : vector<16x112xf32> to vector<16x16xf32>
    %c96 = arith.constant 96 : index
    %c0_16 = arith.constant 0 : index
    %22 = vector.load %arg11[%c96, %c0_16] : memref<112x16xf32, #tpu.memory_space<vmem>>, vector<16x16xf32>
    tpu.vector_store %arg11[%c96, %c0_16], %21 {strides = array<i32>} : memref<112x16xf32, #tpu.memory_space<vmem>>, vector<16x16xf32>,
    %c0_17 = arith.constant 0 : index
    %c0_18 = arith.constant 0 : index
    %23 = vector.load %arg3[%c0_17, %c0_18] : memref<16x112xf32, #tpu.memory_space<vmem>>, vector<16x112xf32>
    %c0_19 = arith.constant 0 : index
    %c0_20 = arith.constant 0 : index
    %24 = vector.load %arg11[%c0_19, %c0_20] : memref<112x16xf32, #tpu.memory_space<vmem>>, vector<112x16xf32>
    %cst_21 = arith.constant dense<0.000000e+00> : vector<16x16xf32>
    %25 = tpu.matmul %23, %24, %cst_21 {dimension_numbers = #tpu.dot_dimension_numbers<[1], [0], [0], [1], [0, 0, 1, 1], [], []>} : vector<16x112xf32>, vector<112x16xf32>, vector<16x16xf32> -> vector<16x16xf32>
    %c0_22 = arith.constant 0 : index
    %c0_23 = arith.constant 0 : index
    %c0_24 = arith.constant 0 : index
    %26 = vector.load %arg7[%c0_22, %c0_23, %c0_24] : memref<2x1x16xf32, #tpu.memory_space<vmem>>, vector<1x1x16xf32>
    %27 = vector.shape_cast %26 : vector<1x1x16xf32> to vector<1x16xf32>
    %28 = vector.broadcast %27 : vector<1x16xf32> to vector<16x16xf32>
    %29 = arith.addf %25, %28 : vector<16x16xf32>
    %c1 = arith.constant 1 : index
    %c0_25 = arith.constant 0 : index
    %c0_26 = arith.constant 0 : index
    %30 = vector.load %arg6[%c1, %c0_25, %c0_26] : memref<2x16x112xf32, #tpu.memory_space<vmem>>, vector<1x16x112xf32>
    %31 = vector.shape_cast %30 : vector<1x16x112xf32> to vector<16x112xf32>
    %cst_27 = arith.constant dense<0.000000e+00> : vector<16x112xf32>
    %32 = tpu.matmul %29, %31, %cst_27 {dimension_numbers = #tpu.dot_dimension_numbers<[1], [0], [0], [1], [0, 0, 1, 1], [], []>} : vector<16x16xf32>, vector<16x112xf32>, vector<16x112xf32> -> vector<16x112xf32>
    %33 = vector.extract_strided_slice %32 {offsets = [0, 0], sizes = [16, 16], strides = [1, 1]} : vector<16x112xf32> to vector<16x16xf32>
    %c0_28 = arith.constant 0 : index
    %c0_29 = arith.constant 0 : index
    %34 = vector.load %arg11[%c0_28, %c0_29] : memref<112x16xf32, #tpu.memory_space<vmem>>, vector<16x16xf32>
    tpu.vector_store %arg11[%c0_28, %c0_29], %33 {strides = array<i32>} : memref<112x16xf32, #tpu.memory_space<vmem>>, vector<16x16xf32>,
    %35 = vector.extract_strided_slice %32 {offsets = [0, 16], sizes = [16, 16], strides = [1, 1]} : vector<16x112xf32> to vector<16x16xf32>
    %c16_30 = arith.constant 16 : index
    %c0_31 = arith.constant 0 : index
    %36 = vector.load %arg11[%c16_30, %c0_31] : memref<112x16xf32, #tpu.memory_space<vmem>>, vector<16x16xf32>
    tpu.vector_store %arg11[%c16_30, %c0_31], %35 {strides = array<i32>} : memref<112x16xf32, #tpu.memory_space<vmem>>, vector<16x16xf32>,
    %37 = vector.extract_strided_slice %32 {offsets = [0, 32], sizes = [16, 16], strides = [1, 1]} : vector<16x112xf32> to vector<16x16xf32>
    %c32_32 = arith.constant 32 : index
    %c0_33 = arith.constant 0 : index
    %38 = vector.load %arg11[%c32_32, %c0_33] : memref<112x16xf32, #tpu.memory_space<vmem>>, vector<16x16xf32>
    tpu.vector_store %arg11[%c32_32, %c0_33], %37 {strides = array<i32>} : memref<112x16xf32, #tpu.memory_space<vmem>>, vector<16x16xf32>,
    %39 = vector.extract_strided_slice %32 {offsets = [0, 48], sizes = [16, 16], strides = [1, 1]} : vector<16x112xf32> to vector<16x16xf32>
    %c48_34 = arith.constant 48 : index
    %c0_35 = arith.constant 0 : index
    %40 = vector.load %arg11[%c48_34, %c0_35] : memref<112x16xf32, #tpu.memory_space<vmem>>, vector<16x16xf32>
    tpu.vector_store %arg11[%c48_34, %c0_35], %39 {strides = array<i32>} : memref<112x16xf32, #tpu.memory_space<vmem>>, vector<16x16xf32>,
    %41 = vector.extract_strided_slice %32 {offsets = [0, 64], sizes = [16, 16], strides = [1, 1]} : vector<16x112xf32> to vector<16x16xf32>
    %c64_36 = arith.constant 64 : index
    %c0_37 = arith.constant 0 : index
    %42 = vector.load %arg11[%c64_36, %c0_37] : memref<112x16xf32, #tpu.memory_space<vmem>>, vector<16x16xf32>
    tpu.vector_store %arg11[%c64_36, %c0_37], %41 {strides = array<i32>} : memref<112x16xf32, #tpu.memory_space<vmem>>, vector<16x16xf32>,
    %43 = vector.extract_strided_slice %32 {offsets = [0, 80], sizes = [16, 16], strides = [1, 1]} : vector<16x112xf32> to vector<16x16xf32>
    %c80_38 = arith.constant 80 : index
    %c0_39 = arith.constant 0 : index
    %44 = vector.load %arg11[%c80_38, %c0_39] : memref<112x16xf32, #tpu.memory_space<vmem>>, vector<16x16xf32>
    tpu.vector_store %arg11[%c80_38, %c0_39], %43 {strides = array<i32>} : memref<112x16xf32, #tpu.memory_space<vmem>>, vector<16x16xf32>,
    %45 = vector.extract_strided_slice %32 {offsets = [0, 96], sizes = [16, 16], strides = [1, 1]} : vector<16x112xf32> to vector<16x16xf32>
    %c96_40 = arith.constant 96 : index
    %c0_41 = arith.constant 0 : index
    %46 = vector.load %arg11[%c96_40, %c0_41] : memref<112x16xf32, #tpu.memory_space<vmem>>, vector<16x16xf32>
    tpu.vector_store %arg11[%c96_40, %c0_41], %45 {strides = array<i32>} : memref<112x16xf32, #tpu.memory_space<vmem>>, vector<16x16xf32>,
    %c0_42 = arith.constant 0 : index
    %c0_43 = arith.constant 0 : index
    %47 = vector.load %arg3[%c0_42, %c0_43] : memref<16x112xf32, #tpu.memory_space<vmem>>, vector<16x112xf32>
    %c0_44 = arith.constant 0 : index
    %c0_45 = arith.constant 0 : index
    %48 = vector.load %arg11[%c0_44, %c0_45] : memref<112x16xf32, #tpu.memory_space<vmem>>, vector<112x16xf32>
    %cst_46 = arith.constant dense<0.000000e+00> : vector<16x16xf32>
    %49 = tpu.matmul %47, %48, %cst_46 {dimension_numbers = #tpu.dot_dimension_numbers<[1], [0], [0], [1], [0, 0, 1, 1], [], []>} : vector<16x112xf32>, vector<112x16xf32>, vector<16x16xf32> -> vector<16x16xf32>
    %c1_47 = arith.constant 1 : index
    %c0_48 = arith.constant 0 : index
    %c0_49 = arith.constant 0 : index
    %50 = vector.load %arg7[%c1_47, %c0_48, %c0_49] : memref<2x1x16xf32, #tpu.memory_space<vmem>>, vector<1x1x16xf32>
    %51 = vector.shape_cast %50 : vector<1x1x16xf32> to vector<1x16xf32>
    %52 = vector.broadcast %51 : vector<1x16xf32> to vector<16x16xf32>
    %53 = arith.addf %49, %52 : vector<16x16xf32>
    %c0_50 = arith.constant 0 : index
    %c0_51 = arith.constant 0 : index
    %54 = vector.load %arg0[%c0_50, %c0_51] : memref<8x3xi32, #tpu.memory_space<vmem>>, vector<8x3xi32>
    %55 = vector.extract_strided_slice %54 {offsets = [0, 0], sizes = [8, 1], strides = [1, 1]} : vector<8x3xi32> to vector<8x1xi32>
    %56 = vector.extract_strided_slice %54 {offsets = [0, 1], sizes = [8, 1], strides = [1, 1]} : vector<8x3xi32> to vector<8x1xi32>
    %57 = vector.extract_strided_slice %54 {offsets = [0, 2], sizes = [8, 1], strides = [1, 1]} : vector<8x3xi32> to vector<8x1xi32>
    %58 = tpu.iota {dimensions = array<i32: 1>} : vector<8x16xi32>
    %59 = tpu.iota {dimensions = array<i32: 1>} : vector<8x8xi32>
    %60 = vector.broadcast %55 : vector<8x1xi32> to vector<8x16xi32>
    %61 = arith.cmpi eq, %58, %60 : vector<8x16xi32>
    %cst_52 = arith.constant 1.000000e+00 : f32
    %cst_53 = arith.constant 0.000000e+00 : f32
    %62 = vector.broadcast %cst_52 : f32 to vector<8x16xf32>
    %63 = vector.broadcast %cst_53 : f32 to vector<8x16xf32>
    %64 = arith.select %61, %62, %63 : vector<8x16xi1>, vector<8x16xf32>
    %65 = vector.broadcast %57 : vector<8x1xi32> to vector<8x16xi32>
    %66 = arith.cmpi eq, %58, %65 : vector<8x16xi32>
    %cst_54 = arith.constant 1.000000e+00 : f32
    %cst_55 = arith.constant 0.000000e+00 : f32
    %67 = vector.broadcast %cst_54 : f32 to vector<8x16xf32>
    %68 = vector.broadcast %cst_55 : f32 to vector<8x16xf32>
    %69 = arith.select %66, %67, %68 : vector<8x16xi1>, vector<8x16xf32>
    %70 = vector.broadcast %56 : vector<8x1xi32> to vector<8x8xi32>
    %71 = arith.cmpi eq, %59, %70 : vector<8x8xi32>
    %cst_56 = arith.constant 1.000000e+00 : f32
    %cst_57 = arith.constant 0.000000e+00 : f32
    %72 = vector.broadcast %cst_56 : f32 to vector<8x8xf32>
    %73 = vector.broadcast %cst_57 : f32 to vector<8x8xf32>
    %74 = arith.select %71, %72, %73 : vector<8x8xi1>, vector<8x8xf32>
    %cst_58 = arith.constant dense<0.000000e+00> : vector<8x16xf32>
    %75 = tpu.matmul %64, %53, %cst_58 {dimension_numbers = #tpu.dot_dimension_numbers<[1], [0], [0], [1], [0, 0, 1, 1], [], []>} : vector<8x16xf32>, vector<16x16xf32>, vector<8x16xf32> -> vector<8x16xf32>
    %cst_59 = arith.constant dense<0.000000e+00> : vector<8x16xf32>
    %76 = tpu.matmul %69, %53, %cst_59 {dimension_numbers = #tpu.dot_dimension_numbers<[1], [0], [0], [1], [0, 0, 1, 1], [], []>} : vector<8x16xf32>, vector<16x16xf32>, vector<8x16xf32> -> vector<8x16xf32>
    %cst_60 = arith.constant dense<0.000000e+00> : vector<8x128xf32>
    %77 = tpu.matmul %64, %0, %cst_60 {dimension_numbers = #tpu.dot_dimension_numbers<[1], [0], [0], [1], [0, 0, 1, 1], [], []>} : vector<8x16xf32>, vector<16x128xf32>, vector<8x128xf32> -> vector<8x128xf32>
    %cst_61 = arith.constant dense<0.000000e+00> : vector<8x128xf32>
    %78 = tpu.matmul %69, %0, %cst_61 {dimension_numbers = #tpu.dot_dimension_numbers<[1], [0], [0], [1], [0, 0, 1, 1], [], []>} : vector<8x16xf32>, vector<16x128xf32>, vector<8x128xf32> -> vector<8x128xf32>
    %c0_62 = arith.constant 0 : index
    %c0_63 = arith.constant 0 : index
    %79 = vector.load %arg2[%c0_62, %c0_63] : memref<8x128xf32, #tpu.memory_space<vmem>>, vector<8x128xf32>
    %cst_64 = arith.constant dense<0.000000e+00> : vector<8x128xf32>
    %80 = tpu.matmul %74, %79, %cst_64 {dimension_numbers = #tpu.dot_dimension_numbers<[1], [0], [0], [1], [0, 0, 1, 1], [], []>} : vector<8x8xf32>, vector<8x128xf32>, vector<8x128xf32> -> vector<8x128xf32>
    %c0_65 = arith.constant 0 : index
    %c0_66 = arith.constant 0 : index
    %81 = vector.load %arg8[%c0_65, %c0_66] : memref<16x128xf32, #tpu.memory_space<vmem>>, vector<16x128xf32>
    %c0_67 = arith.constant 0 : index
    %c0_68 = arith.constant 0 : index
    %82 = vector.load %arg9[%c0_67, %c0_68] : memref<1x128xf32, #tpu.memory_space<vmem>>, vector<1x128xf32>
    %cst_69 = arith.constant dense<0.000000e+00> : vector<8x128xf32>
    %83 = tpu.matmul %75, %81, %cst_69 {dimension_numbers = #tpu.dot_dimension_numbers<[1], [0], [0], [1], [0, 0, 1, 1], [], []>} : vector<8x16xf32>, vector<16x128xf32>, vector<8x128xf32> -> vector<8x128xf32>
    %84 = arith.addf %77, %83 : vector<8x128xf32>
    %85 = vector.broadcast %82 : vector<1x128xf32> to vector<8x128xf32>
    %86 = arith.addf %84, %85 : vector<8x128xf32>
    %cst_70 = arith.constant dense<0.000000e+00> : vector<8x128xf32>
    %87 = tpu.matmul %76, %81, %cst_70 {dimension_numbers = #tpu.dot_dimension_numbers<[1], [0], [0], [1], [0, 0, 1, 1], [], []>} : vector<8x16xf32>, vector<16x128xf32>, vector<8x128xf32> -> vector<8x128xf32>
    %88 = arith.addf %78, %87 : vector<8x128xf32>
    %89 = vector.broadcast %82 : vector<1x128xf32> to vector<8x128xf32>
    %90 = arith.addf %88, %89 : vector<8x128xf32>
    %91 = arith.mulf %86, %80 : vector<8x128xf32>
    %92 = arith.mulf %91, %90 : vector<8x128xf32>
    %cst_71 = arith.constant dense<0.000000e+00> : vector<8xf32>
    %93 = vector.multi_reduction <add>, %92, %cst_71 [1] : vector<8x128xf32> to vector<8xf32>
    %94 = vector.shape_cast %93 : vector<8xf32> to vector<8x1xf32>
    %c0_72 = arith.constant 0 : index
    %c0_73 = arith.constant 0 : index
    %95 = vector.load %arg10[%c0_72, %c0_73] : memref<8x1xf32, #tpu.memory_space<vmem>>, vector<8x1xf32>
    tpu.vector_store %arg10[%c0_72, %c0_73], %94 {strides = array<i32>} : memref<8x1xf32, #tpu.memory_space<vmem>>, vector<8x1xf32>,
    return
  }
}

</mosaic_0001>

<llo_original>
// kernel: tpu_custom_call.1
$region0: #{tpu_custom_call.1}
  #allocation0 [shape = 'u32[]', space=smem, size = 0x4, offset = 0x4, fixed_abs, tag = 'smem constant byte address 0x4 - core index']
  #allocation1 [shape = 'u32[144,128]{1,0:T(1,128)}', space=vmem, size = 0x12000, scoped, tag = 'internal scratch']
  #allocation2 [shape = 'f32[112,16]{1,0:T(8,128)}', space=vmem, size = 0xe000, scoped, tag = 'scratch operand']
  %s0 = inlined_call_operand.vmem [shape: s32[8,3], index: 0, kind: input, shape index: {}]
  %s1 = inlined_call_operand.vmem [shape: f32[16,128], index: 1, kind: input, shape index: {}]
  %s2 = inlined_call_operand.vmem [shape: f32[8,128], index: 2, kind: input, shape index: {}]
  %s3 = inlined_call_operand.vmem [shape: f32[16,112], index: 3, kind: input, shape index: {}]
  %s4 = inlined_call_operand.vmem [shape: f32[128,16], index: 4, kind: input, shape index: {}]
  %s5 = inlined_call_operand.vmem [shape: f32[1,16], index: 5, kind: input, shape index: {}]
  %s6 = inlined_call_operand.vmem [shape: f32[2,16,112], index: 6, kind: input, shape index: {}]
  %s7 = inlined_call_operand.vmem [shape: f32[2,1,16], index: 7, kind: input, shape index: {}]
  %s8 = inlined_call_operand.vmem [shape: f32[16,128], index: 8, kind: input, shape index: {}]
  %s9 = inlined_call_operand.vmem [shape: f32[1,128], index: 9, kind: input, shape index: {}]
  %s10 = inlined_call_operand.vmem [shape: f32[8,1], index: 10, kind: output, shape index: {}]
  %s11 = sld [smem:[#allocation0]]
  $region50: #{tpu_custom_call.1} parent=0
    _
  %s13 = ssub.s32 1, %s11
  %s14 = scalar_select 0, %s13, %s11
  // Predicated region
  $region2: #{tpu_custom_call.1} parent=0 // pred_check
    _
  $region3: #{tpu_custom_call.1} parent=0 // pred_check_branch
    %16 = sbr.rel (0) target = $region5
  $region4: #{tpu_custom_call.1} parent=0 // pred_region
    _
  $region5: #{tpu_custom_call.1} parent=0 // pred_fallthru
    _
  // Predicated region
  $region6: #{tpu_custom_call.1} parent=0 // pred_check
    _
  $region7: #{tpu_custom_call.1} parent=0 // pred_check_branch
    %18 = sbr.rel (0) target = $region9
  $region8: #{tpu_custom_call.1} parent=0 // pred_region
    _
  $region9: #{tpu_custom_call.1} parent=0 // pred_fallthru
    _
  // Predicated region
  $region10: #{tpu_custom_call.1} parent=0 // pred_check
    _
  $region11: #{tpu_custom_call.1} parent=0 // pred_check_branch
    %20 = sbr.rel (0) target = $region13
  $region12: #{tpu_custom_call.1} parent=0 // pred_region
    _
  $region13: #{tpu_custom_call.1} parent=0 // pred_fallthru
    _
  // Predicated region
  $region14: #{tpu_custom_call.1} parent=0 // pred_check
    _
  $region15: #{tpu_custom_call.1} parent=0 // pred_check_branch
    %22 = sbr.rel (0) target = $region17
  $region16: #{tpu_custom_call.1} parent=0 // pred_region
    _
  $region17: #{tpu_custom_call.1} parent=0 // pred_fallthru
    _
  // Predicated region
  $region18: #{tpu_custom_call.1} parent=0 // pred_check
    _
  $region19: #{tpu_custom_call.1} parent=0 // pred_check_branch
    %24 = sbr.rel (0) target = $region21
  $region20: #{tpu_custom_call.1} parent=0 // pred_region
    _
  $region21: #{tpu_custom_call.1} parent=0 // pred_fallthru
    _
  // Predicated region
  $region22: #{tpu_custom_call.1} parent=0 // pred_check
    _
  $region23: #{tpu_custom_call.1} parent=0 // pred_check_branch
    %26 = sbr.rel (0) target = $region25
  $region24: #{tpu_custom_call.1} parent=0 // pred_region
    _
  $region25: #{tpu_custom_call.1} parent=0 // pred_fallthru
    _
  // Predicated region
  $region26: #{tpu_custom_call.1} parent=0 // pred_check
    _
  $region27: #{tpu_custom_call.1} parent=0 // pred_check_branch
    %28 = sbr.rel (0) target = $region29
  $region28: #{tpu_custom_call.1} parent=0 // pred_region
    _
  $region29: #{tpu_custom_call.1} parent=0 // pred_fallthru
    _
  // Predicated region
  $region30: #{tpu_custom_call.1} parent=0 // pred_check
    _
  $region31: #{tpu_custom_call.1} parent=0 // pred_check_branch
    %30 = sbr.rel (0) target = $region33
  $region32: #{tpu_custom_call.1} parent=0 // pred_region
    _
  $region33: #{tpu_custom_call.1} parent=0 // pred_fallthru
    _
  // Predicated region
  $region34: #{tpu_custom_call.1} parent=0 // pred_check
    _
  $region35: #{tpu_custom_call.1} parent=0 // pred_check_branch
    %32 = sbr.rel (0) target = $region37
  $region36: #{tpu_custom_call.1} parent=0 // pred_region
    _
  $region37: #{tpu_custom_call.1} parent=0 // pred_fallthru
    _
  // Predicated region
  $region38: #{tpu_custom_call.1} parent=0 // pred_check
    _
  $region39: #{tpu_custom_call.1} parent=0 // pred_check_branch
    %34 = sbr.rel (0) target = $region41
  $region40: #{tpu_custom_call.1} parent=0 // pred_region
    _
  $region41: #{tpu_custom_call.1} parent=0 // pred_fallthru
    _
  %v35 = vld [vmem:[%s1] sm:$0xff]
  %v36 = vld [vmem:[%s1 + $0x8] sm:$0xff]
  %v37 = vld [vmem:[%s4] sm:$0xff]
  %v38 = vld [vmem:[%s4 + $0x8] sm:$0xff]
  %v39 = vld [vmem:[%s4 + $0x10] sm:$0xff]
  %v40 = vld [vmem:[%s4 + $0x18] sm:$0xff]
  %v41 = vld [vmem:[%s4 + $0x20] sm:$0xff]
  %v42 = vld [vmem:[%s4 + $0x28] sm:$0xff]
  %v43 = vld [vmem:[%s4 + $0x30] sm:$0xff]
  %v44 = vld [vmem:[%s4 + $0x38] sm:$0xff]
  %v45 = vld [vmem:[%s4 + $0x40] sm:$0xff]
  %v46 = vld [vmem:[%s4 + $0x48] sm:$0xff]
  %v47 = vld [vmem:[%s4 + $0x50] sm:$0xff]
  %v48 = vld [vmem:[%s4 + $0x58] sm:$0xff]
  %v49 = vld [vmem:[%s4 + $0x60] sm:$0xff]
  %v50 = vld [vmem:[%s4 + $0x68] sm:$0xff]
  %v51 = vld [vmem:[%s4 + $0x70] sm:$0xff]
  %v52 = vld [vmem:[%s4 + $0x78] sm:$0xff]
  %v53 = vld [vmem:[%s5] sm:$0x1]
  %v55 = vlaneseq
  %v56 = vshrl.u32 %v55, 7
  %v57 = vsub.s32 0, %v56
  %v58 = vrot.slane %v53, %v57
  %60 = vmatprep.subr.mxu0 0.0
  %61 = vmatpush1.msra.mxu0 %v52
  %62 = vmatprep.subr.mxu0 0.0
  %63 = vmatpush1.msra.mxu0 %v51
  %64 = vmatprep.subr.mxu0 0.0
  %65 = vmatpush1.msra.mxu0 %v50
  %66 = vmatprep.subr.mxu0 0.0
  %67 = vmatpush1.msra.mxu0 %v49
  %68 = vmatprep.subr.mxu0 0.0
  %69 = vmatpush1.msra.mxu0 %v48
  %70 = vmatprep.subr.mxu0 0.0
  %71 = vmatpush1.msra.mxu0 %v47
  %72 = vmatprep.subr.mxu0 0.0
  %73 = vmatpush1.msra.mxu0 %v46
  %74 = vmatprep.subr.mxu0 0.0
  %75 = vmatpush1.msra.mxu0 %v45
  %76 = vmatprep.subr.mxu0 0.0
  %77 = vmatpush1.msra.mxu0 %v44
  %78 = vmatprep.subr.mxu0 0.0
  %79 = vmatpush1.msra.mxu0 %v43
  %80 = vmatprep.subr.mxu0 0.0
  %81 = vmatpush1.msra.mxu0 %v42
  %82 = vmatprep.subr.mxu0 0.0
  %83 = vmatpush1.msra.mxu0 %v41
  %84 = vmatprep.subr.mxu0 0.0
  %85 = vmatpush1.msra.mxu0 %v40
  %86 = vmatprep.subr.mxu0 0.0
  %87 = vmatpush1.msra.mxu0 %v39
  %88 = vmatprep.subr.mxu0 0.0
  %89 = vmatpush1.msra.mxu0 %v38
  %90 = vmatprep.subr.mxu0 0.0
  %91 = vmatpush1.msra.mxu0 %v37
  %92 = vmatprep.subr.mxu0 0.0
  %93 = vmatpush2.msra.mxu0 0.0
  %94 = vmatprep.subr.mxu0 0.0
  %95 = vmatpush2.msra.mxu0 0.0
  %96 = vmatprep.subr.mxu0 0.0
  %97 = vmatpush2.msra.mxu0 0.0
  %98 = vmatprep.subr.mxu0 0.0
  %99 = vmatpush2.msra.mxu0 0.0
  %100 = vmatprep.subr.mxu0 0.0
  %101 = vmatpush2.msra.mxu0 0.0
  %102 = vmatprep.subr.mxu0 0.0
  %103 = vmatpush2.msra.mxu0 0.0
  %104 = vmatprep.subr.mxu0 0.0
  %105 = vmatpush2.msra.mxu0 0.0
  %106 = vmatprep.subr.mxu0 0.0
  %107 = vmatpush2.msra.mxu0 0.0
  %108 = vmatprep.subr.mxu0 0.0
  %109 = vmatpush2.msra.mxu0 0.0
  %110 = vmatprep.subr.mxu0 0.0
  %111 = vmatpush2.msra.mxu0 0.0
  %112 = vmatprep.subr.mxu0 0.0
  %113 = vmatpush2.msra.mxu0 0.0
  %114 = vmatprep.subr.mxu0 0.0
  %115 = vmatpush2.msra.mxu0 0.0
  %116 = vmatprep.subr.mxu0 0.0
  %117 = vmatpush2.msra.mxu0 0.0
  %118 = vmatprep.subr.mxu0 0.0
  %119 = vmatpush2.msra.mxu0 0.0
  %120 = vmatprep.subr.mxu0 0.0
  %121 = vmatpush2.msra.mxu0 0.0
  %122 = vmatprep.subr.mxu0 0.0
  %123 = vmatpush2.msra.mxu0 0.0
  %124 = vmatprep.mubr.f32.mxu0 0.0
  %125 = vmatmul.mubr.f32.gmra.mxu0 %v35
  %v126 = vpop.f32.mrf.mxu0
  %v127 = vadd.f32 %v58, %v126
  %v128 = vpop.f32.mrf.mxu0
  %129 = vmatprep.mubr.f32.mxu0 0.0
  %130 = vmatmul.mubr.f32.gmra.mxu0 %v36
  %v131 = vpop.f32.mrf.mxu0
  %v132 = vadd.f32 %v58, %v131
  %v133 = vpop.f32.mrf.mxu0
  %134 = vdwg.mxu0
  %v135 = vld [vmem:[%s6] sm:$0xff]
  %v136 = vld [vmem:[%s6 + $0x8] sm:$0xff]
  %vm137 = vcmask 130048
  %v139 = vsel %vm137, %v127, 0
  %v142 = vsel %vm137, %v132, 0
  %144 = vmatprep.subr.mxu0 0.0
  %145 = vmatpush1.msra.mxu0 0.0
  %146 = vmatprep.subr.mxu0 0.0
  %147 = vmatpush1.msra.mxu0 0.0
  %148 = vmatprep.subr.mxu0 0.0
  %149 = vmatpush1.msra.mxu0 0.0
  %150 = vmatprep.subr.mxu0 0.0
  %151 = vmatpush1.msra.mxu0 0.0
  %152 = vmatprep.subr.mxu0 0.0
  %153 = vmatpush1.msra.mxu0 0.0
  %154 = vmatprep.subr.mxu0 0.0
  %155 = vmatpush1.msra.mxu0 0.0
  %156 = vmatprep.subr.mxu0 0.0
  %157 = vmatpush1.msra.mxu0 0.0
  %158 = vmatprep.subr.mxu0 0.0
  %159 = vmatpush1.msra.mxu0 0.0
  %160 = vmatprep.subr.mxu0 0.0
  %161 = vmatpush1.msra.mxu0 0.0
  %162 = vmatprep.subr.mxu0 0.0
  %163 = vmatpush1.msra.mxu0 0.0
  %164 = vmatprep.subr.mxu0 0.0
  %165 = vmatpush1.msra.mxu0 0.0
  %166 = vmatprep.subr.mxu0 0.0
  %167 = vmatpush1.msra.mxu0 0.0
  %168 = vmatprep.subr.mxu0 0.0
  %169 = vmatpush1.msra.mxu0 0.0
  %170 = vmatprep.subr.mxu0 0.0
  %171 = vmatpush1.msra.mxu0 0.0
  %172 = vmatprep.subr.mxu0 0.0
  %173 = vmatpush1.msra.mxu0 %v136
  %174 = vmatprep.subr.mxu0 0.0
  %175 = vmatpush1.msra.mxu0 %v135
  %176 = vmatprep.subr.mxu0 0.0
  %177 = vmatpush2.msra.mxu0 0.0
  %178 = vmatprep.subr.mxu0 0.0
  %179 = vmatpush2.msra.mxu0 0.0
  %180 = vmatprep.subr.mxu0 0.0
  %181 = vmatpush2.msra.mxu0 0.0
  %182 = vmatprep.subr.mxu0 0.0
  %183 = vmatpush2.msra.mxu0 0.0
  %184 = vmatprep.subr.mxu0 0.0
  %185 = vmatpush2.msra.mxu0 0.0
  %186 = vmatprep.subr.mxu0 0.0
  %187 = vmatpush2.msra.mxu0 0.0
  %188 = vmatprep.subr.mxu0 0.0
  %189 = vmatpush2.msra.mxu0 0.0
  %190 = vmatprep.subr.mxu0 0.0
  %191 = vmatpush2.msra.mxu0 0.0
  %192 = vmatprep.subr.mxu0 0.0
  %193 = vmatpush2.msra.mxu0 0.0
  %194 = vmatprep.subr.mxu0 0.0
  %195 = vmatpush2.msra.mxu0 0.0
  %196 = vmatprep.subr.mxu0 0.0
  %197 = vmatpush2.msra.mxu0 0.0
  %198 = vmatprep.subr.mxu0 0.0
  %199 = vmatpush2.msra.mxu0 0.0
  %200 = vmatprep.subr.mxu0 0.0
  %201 = vmatpush2.msra.mxu0 0.0
  %202 = vmatprep.subr.mxu0 0.0
  %203 = vmatpush2.msra.mxu0 0.0
  %204 = vmatprep.subr.mxu0 0.0
  %205 = vmatpush2.msra.mxu0 0.0
  %206 = vmatprep.subr.mxu0 0.0
  %207 = vmatpush2.msra.mxu0 0.0
  %208 = vmatprep.mubr.f32.mxu0 0.0
  %209 = vmatmul.mubr.f32.gmra.mxu0 %v139
  %v210 = vpop.f32.mrf.mxu0
  %v211 = vadd.f32 0.0, %v210
  %v212 = vpop.f32.mrf.mxu0
  %213 = vmatprep.mubr.f32.mxu0 0.0
  %214 = vmatmul.mubr.f32.gmra.mxu0 %v142
  %v215 = vpop.f32.mrf.mxu0
  %v216 = vadd.f32 0.0, %v215
  %v217 = vpop.f32.mrf.mxu0
  %218 = vdwg.mxu0
  %219 = vst.msk [vmem:[#allocation2] sm:$0xff] %vm137, %v211
  %220 = vst.msk [vmem:[#allocation2 + $0x8] sm:$0xff] %vm137, %v216
  %223 = vrot.lane.b32.xlu0 %v211, 112
  %v224 = vpop.permute.xlu0 %223
  %225 = vrot.lane.b32.xlu0 %v216, 112
  %v226 = vpop.permute.xlu0 %225
  %229 = vst.msk [vmem:[#allocation2 + $0x10] sm:$0xff] %vm137, %v224
  %230 = vst.msk [vmem:[#allocation2 + $0x18] sm:$0xff] %vm137, %v226
  %231 = vrot.lane.b32.xlu0 %v211, 96
  %v232 = vpop.permute.xlu0 %231
  %233 = vrot.lane.b32.xlu0 %v216, 96
  %v234 = vpop.permute.xlu0 %233
  %237 = vst.msk [vmem:[#allocation2 + $0x20] sm:$0xff] %vm137, %v232
  %238 = vst.msk [vmem:[#allocation2 + $0x28] sm:$0xff] %vm137, %v234
  %239 = vrot.lane.b32.xlu0 %v211, 80
  %v240 = vpop.permute.xlu0 %239
  %241 = vrot.lane.b32.xlu0 %v216, 80
  %v242 = vpop.permute.xlu0 %241
  %245 = vst.msk [vmem:[#allocation2 + $0x30] sm:$0xff] %vm137, %v240
  %246 = vst.msk [vmem:[#allocation2 + $0x38] sm:$0xff] %vm137, %v242
  %247 = vrot.lane.b32.xlu0 %v211, 64
  %v248 = vpop.permute.xlu0 %247
  %249 = vrot.lane.b32.xlu0 %v216, 64
  %v250 = vpop.permute.xlu0 %249
  %253 = vst.msk [vmem:[#allocation2 + $0x40] sm:$0xff] %vm137, %v248
  %254 = vst.msk [vmem:[#allocation2 + $0x48] sm:$0xff] %vm137, %v250
  %255 = vrot.lane.b32.xlu0 %v211, 48
  %v256 = vpop.permute.xlu0 %255
  %257 = vrot.lane.b32.xlu0 %v216, 48
  %v258 = vpop.permute.xlu0 %257
  %261 = vst.msk [vmem:[#allocation2 + $0x50] sm:$0xff] %vm137, %v256
  %262 = vst.msk [vmem:[#allocation2 + $0x58] sm:$0xff] %vm137, %v258
  %263 = vrot.lane.b32.xlu0 %v211, 32
  %v264 = vpop.permute.xlu0 %263
  %265 = vrot.lane.b32.xlu0 %v216, 32
  %v266 = vpop.permute.xlu0 %265
  %269 = vst.msk [vmem:[#allocation2 + $0x60] sm:$0xff] %vm137, %v264
  %270 = vst.msk [vmem:[#allocation2 + $0x68] sm:$0xff] %vm137, %v266
  %v271 = vld [vmem:[%s3] sm:$0xff]
  %v272 = vld [vmem:[%s3 + $0x8] sm:$0xff]
  %v273 = vld [vmem:[#allocation2] sm:$0xff]
  %v274 = vld [vmem:[#allocation2 + $0x8] sm:$0xff]
  %v275 = vld [vmem:[#allocation2 + $0x10] sm:$0xff]
  %v276 = vld [vmem:[#allocation2 + $0x18] sm:$0xff]
  %v277 = vld [vmem:[#allocation2 + $0x20] sm:$0xff]
  %v278 = vld [vmem:[#allocation2 + $0x28] sm:$0xff]
  %v279 = vld [vmem:[#allocation2 + $0x30] sm:$0xff]
  %v280 = vld [vmem:[#allocation2 + $0x38] sm:$0xff]
  %v281 = vld [vmem:[#allocation2 + $0x40] sm:$0xff]
  %v282 = vld [vmem:[#allocation2 + $0x48] sm:$0xff]
  %v283 = vld [vmem:[#allocation2 + $0x50] sm:$0xff]
  %v284 = vld [vmem:[#allocation2 + $0x58] sm:$0xff]
  %v285 = vld [vmem:[#allocation2 + $0x60] sm:$0xff]
  %v286 = vld [vmem:[#allocation2 + $0x68] sm:$0xff]
  %v287 = vld [vmem:[%s7] sm:$0x1]
  %v289 = vlaneseq
  %v290 = vshrl.u32 %v289, 7
  %v291 = vsub.s32 0, %v290
  %v292 = vrot.slane %v287, %v291
  %vm294 = vcmask 916480
  %v296 = vsel %vm294, %v271, 0
  %v299 = vsel %vm294, %v272, 0
  %301 = vmatprep.subr.mxu0 0.0
  %302 = vmatpush1.msra.mxu0 0.0
  %303 = vmatprep.subr.mxu0 0.0
  %304 = vmatpush1.msra.mxu0 0.0
  %305 = vmatprep.subr.mxu0 0.0
  %306 = vmatpush1.msra.mxu0 %v286
  %307 = vmatprep.subr.mxu0 0.0
  %308 = vmatpush1.msra.mxu0 %v285
  %309 = vmatprep.subr.mxu0 0.0
  %310 = vmatpush1.msra.mxu0 %v284
  %311 = vmatprep.subr.mxu0 0.0
  %312 = vmatpush1.msra.mxu0 %v283
  %313 = vmatprep.subr.mxu0 0.0
  %314 = vmatpush1.msra.mxu0 %v282
  %315 = vmatprep.subr.mxu0 0.0
  %316 = vmatpush1.msra.mxu0 %v281
  %317 = vmatprep.subr.mxu0 0.0
  %318 = vmatpush1.msra.mxu0 %v280
  %319 = vmatprep.subr.mxu0 0.0
  %320 = vmatpush1.msra.mxu0 %v279
  %321 = vmatprep.subr.mxu0 0.0
  %322 = vmatpush1.msra.mxu0 %v278
  %323 = vmatprep.subr.mxu0 0.0
  %324 = vmatpush1.msra.mxu0 %v277
  %325 = vmatprep.subr.mxu0 0.0
  %326 = vmatpush1.msra.mxu0 %v276
  %327 = vmatprep.subr.mxu0 0.0
  %328 = vmatpush1.msra.mxu0 %v275
  %329 = vmatprep.subr.mxu0 0.0
  %330 = vmatpush1.msra.mxu0 %v274
  %331 = vmatprep.subr.mxu0 0.0
  %332 = vmatpush1.msra.mxu0 %v273
  %333 = vmatprep.subr.mxu0 0.0
  %334 = vmatpush2.msra.mxu0 0.0
  %335 = vmatprep.subr.mxu0 0.0
  %336 = vmatpush2.msra.mxu0 0.0
  %337 = vmatprep.subr.mxu0 0.0
  %338 = vmatpush2.msra.mxu0 0.0
  %339 = vmatprep.subr.mxu0 0.0
  %340 = vmatpush2.msra.mxu0 0.0
  %341 = vmatprep.subr.mxu0 0.0
  %342 = vmatpush2.msra.mxu0 0.0
  %343 = vmatprep.subr.mxu0 0.0
  %344 = vmatpush2.msra.mxu0 0.0
  %345 = vmatprep.subr.mxu0 0.0
  %346 = vmatpush2.msra.mxu0 0.0
  %347 = vmatprep.subr.mxu0 0.0
  %348 = vmatpush2.msra.mxu0 0.0
  %349 = vmatprep.subr.mxu0 0.0
  %350 = vmatpush2.msra.mxu0 0.0
  %351 = vmatprep.subr.mxu0 0.0
  %352 = vmatpush2.msra.mxu0 0.0
  %353 = vmatprep.subr.mxu0 0.0
  %354 = vmatpush2.msra.mxu0 0.0
  %355 = vmatprep.subr.mxu0 0.0
  %356 = vmatpush2.msra.mxu0 0.0
  %357 = vmatprep.subr.mxu0 0.0
  %358 = vmatpush2.msra.mxu0 0.0
  %359 = vmatprep.subr.mxu0 0.0
  %360 = vmatpush2.msra.mxu0 0.0
  %361 = vmatprep.subr.mxu0 0.0
  %362 = vmatpush2.msra.mxu0 0.0
  %363 = vmatprep.subr.mxu0 0.0
  %364 = vmatpush2.msra.mxu0 0.0
  %365 = vmatprep.mubr.f32.mxu0 0.0
  %366 = vmatmul.mubr.f32.gmra.mxu0 %v296
  %v367 = vpop.f32.mrf.mxu0
  %v368 = vadd.f32 %v292, %v367
  %v369 = vpop.f32.mrf.mxu0
  %370 = vmatprep.mubr.f32.mxu0 0.0
  %371 = vmatmul.mubr.f32.gmra.mxu0 %v299
  %v372 = vpop.f32.mrf.mxu0
  %v373 = vadd.f32 %v292, %v372
  %v374 = vpop.f32.mrf.mxu0
  %375 = vdwg.mxu0
  %s376 = scalar_lea.vmem %s6, 16
  %v377 = vld [vmem:[%s376] sm:$0xff]
  %v378 = vld [vmem:[%s376 + $0x8] sm:$0xff]
  %v380 = vsel %vm137, %v368, 0
  %v383 = vsel %vm137, %v373, 0
  %385 = vmatprep.subr.mxu0 0.0
  %386 = vmatpush1.msra.mxu0 0.0
  %387 = vmatprep.subr.mxu0 0.0
  %388 = vmatpush1.msra.mxu0 0.0
  %389 = vmatprep.subr.mxu0 0.0
  %390 = vmatpush1.msra.mxu0 0.0
  %391 = vmatprep.subr.mxu0 0.0
  %392 = vmatpush1.msra.mxu0 0.0
  %393 = vmatprep.subr.mxu0 0.0
  %394 = vmatpush1.msra.mxu0 0.0
  %395 = vmatprep.subr.mxu0 0.0
  %396 = vmatpush1.msra.mxu0 0.0
  %397 = vmatprep.subr.mxu0 0.0
  %398 = vmatpush1.msra.mxu0 0.0
  %399 = vmatprep.subr.mxu0 0.0
  %400 = vmatpush1.msra.mxu0 0.0
  %401 = vmatprep.subr.mxu0 0.0
  %402 = vmatpush1.msra.mxu0 0.0
  %403 = vmatprep.subr.mxu0 0.0
  %404 = vmatpush1.msra.mxu0 0.0
  %405 = vmatprep.subr.mxu0 0.0
  %406 = vmatpush1.msra.mxu0 0.0
  %407 = vmatprep.subr.mxu0 0.0
  %408 = vmatpush1.msra.mxu0 0.0
  %409 = vmatprep.subr.mxu0 0.0
  %410 = vmatpush1.msra.mxu0 0.0
  %411 = vmatprep.subr.mxu0 0.0
  %412 = vmatpush1.msra.mxu0 0.0
  %413 = vmatprep.subr.mxu0 0.0
  %414 = vmatpush1.msra.mxu0 %v378
  %415 = vmatprep.subr.mxu0 0.0
  %416 = vmatpush1.msra.mxu0 %v377
  %417 = vmatprep.subr.mxu0 0.0
  %418 = vmatpush2.msra.mxu0 0.0
  %419 = vmatprep.subr.mxu0 0.0
  %420 = vmatpush2.msra.mxu0 0.0
  %421 = vmatprep.subr.mxu0 0.0
  %422 = vmatpush2.msra.mxu0 0.0
  %423 = vmatprep.subr.mxu0 0.0
  %424 = vmatpush2.msra.mxu0 0.0
  %425 = vmatprep.subr.mxu0 0.0
  %426 = vmatpush2.msra.mxu0 0.0
  %427 = vmatprep.subr.mxu0 0.0
  %428 = vmatpush2.msra.mxu0 0.0
  %429 = vmatprep.subr.mxu0 0.0
  %430 = vmatpush2.msra.mxu0 0.0
  %431 = vmatprep.subr.mxu0 0.0
  %432 = vmatpush2.msra.mxu0 0.0
  %433 = vmatprep.subr.mxu0 0.0
  %434 = vmatpush2.msra.mxu0 0.0
  %435 = vmatprep.subr.mxu0 0.0
  %436 = vmatpush2.msra.mxu0 0.0
  %437 = vmatprep.subr.mxu0 0.0
  %438 = vmatpush2.msra.mxu0 0.0
  %439 = vmatprep.subr.mxu0 0.0
  %440 = vmatpush2.msra.mxu0 0.0
  %441 = vmatprep.subr.mxu0 0.0
  %442 = vmatpush2.msra.mxu0 0.0
  %443 = vmatprep.subr.mxu0 0.0
  %444 = vmatpush2.msra.mxu0 0.0
  %445 = vmatprep.subr.mxu0 0.0
  %446 = vmatpush2.msra.mxu0 0.0
  %447 = vmatprep.subr.mxu0 0.0
  %448 = vmatpush2.msra.mxu0 0.0
  %449 = vmatprep.mubr.f32.mxu0 0.0
  %450 = vmatmul.mubr.f32.gmra.mxu0 %v380
  %v451 = vpop.f32.mrf.mxu0
  %v452 = vadd.f32 0.0, %v451
  %v453 = vpop.f32.mrf.mxu0
  %454 = vmatprep.mubr.f32.mxu0 0.0
  %455 = vmatmul.mubr.f32.gmra.mxu0 %v383
  %v456 = vpop.f32.mrf.mxu0
  %v457 = vadd.f32 0.0, %v456
  %v458 = vpop.f32.mrf.mxu0
  %459 = vdwg.mxu0
  %460 = vst.msk [vmem:[#allocation2] sm:$0xff] %vm137, %v452
  %461 = vst.msk [vmem:[#allocation2 + $0x8] sm:$0xff] %vm137, %v457
  %464 = vrot.lane.b32.xlu0 %v452, 112
  %v465 = vpop.permute.xlu0 %464
  %466 = vrot.lane.b32.xlu0 %v457, 112
  %v467 = vpop.permute.xlu0 %466
  %470 = vst.msk [vmem:[#allocation2 + $0x10] sm:$0xff] %vm137, %v465
  %471 = vst.msk [vmem:[#allocation2 + $0x18] sm:$0xff] %vm137, %v467
  %472 = vrot.lane.b32.xlu0 %v452, 96
  %v473 = vpop.permute.xlu0 %472
  %474 = vrot.lane.b32.xlu0 %v457, 96
  %v475 = vpop.permute.xlu0 %474
  %478 = vst.msk [vmem:[#allocation2 + $0x20] sm:$0xff] %vm137, %v473
  %479 = vst.msk [vmem:[#allocation2 + $0x28] sm:$0xff] %vm137, %v475
  %480 = vrot.lane.b32.xlu0 %v452, 80
  %v481 = vpop.permute.xlu0 %480
  %482 = vrot.lane.b32.xlu0 %v457, 80
  %v483 = vpop.permute.xlu0 %482
  %486 = vst.msk [vmem:[#allocation2 + $0x30] sm:$0xff] %vm137, %v481
  %487 = vst.msk [vmem:[#allocation2 + $0x38] sm:$0xff] %vm137, %v483
  %488 = vrot.lane.b32.xlu0 %v452, 64
  %v489 = vpop.permute.xlu0 %488
  %490 = vrot.lane.b32.xlu0 %v457, 64
  %v491 = vpop.permute.xlu0 %490
  %494 = vst.msk [vmem:[#allocation2 + $0x40] sm:$0xff] %vm137, %v489
  %495 = vst.msk [vmem:[#allocation2 + $0x48] sm:$0xff] %vm137, %v491
  %496 = vrot.lane.b32.xlu0 %v452, 48
  %v497 = vpop.permute.xlu0 %496
  %498 = vrot.lane.b32.xlu0 %v457, 48
  %v499 = vpop.permute.xlu0 %498
  %502 = vst.msk [vmem:[#allocation2 + $0x50] sm:$0xff] %vm137, %v497
  %503 = vst.msk [vmem:[#allocation2 + $0x58] sm:$0xff] %vm137, %v499
  %504 = vrot.lane.b32.xlu0 %v452, 32
  %v505 = vpop.permute.xlu0 %504
  %506 = vrot.lane.b32.xlu0 %v457, 32
  %v507 = vpop.permute.xlu0 %506
  %510 = vst.msk [vmem:[#allocation2 + $0x60] sm:$0xff] %vm137, %v505
  %511 = vst.msk [vmem:[#allocation2 + $0x68] sm:$0xff] %vm137, %v507
  %v512 = vld [vmem:[%s3] sm:$0xff]
  %v513 = vld [vmem:[%s3 + $0x8] sm:$0xff]
  %v514 = vld [vmem:[#allocation2] sm:$0xff]
  %v515 = vld [vmem:[#allocation2 + $0x8] sm:$0xff]
  %v516 = vld [vmem:[#allocation2 + $0x10] sm:$0xff]
  %v517 = vld [vmem:[#allocation2 + $0x18] sm:$0xff]
  %v518 = vld [vmem:[#allocation2 + $0x20] sm:$0xff]
  %v519 = vld [vmem:[#allocation2 + $0x28] sm:$0xff]
  %v520 = vld [vmem:[#allocation2 + $0x30] sm:$0xff]
  %v521 = vld [vmem:[#allocation2 + $0x38] sm:$0xff]
  %v522 = vld [vmem:[#allocation2 + $0x40] sm:$0xff]
  %v523 = vld [vmem:[#allocation2 + $0x48] sm:$0xff]
  %v524 = vld [vmem:[#allocation2 + $0x50] sm:$0xff]
  %v525 = vld [vmem:[#allocation2 + $0x58] sm:$0xff]
  %v526 = vld [vmem:[#allocation2 + $0x60] sm:$0xff]
  %v527 = vld [vmem:[#allocation2 + $0x68] sm:$0xff]
  %s528 = scalar_lea.vmem %s7, 1
  %v529 = vld [vmem:[%s528] sm:$0x1]
  %v531 = vlaneseq
  %v532 = vshrl.u32 %v531, 7
  %v533 = vsub.s32 0, %v532
  %v534 = vrot.slane %v529, %v533
  %v537 = vsel %vm294, %v512, 0
  %v540 = vsel %vm294, %v513, 0
  %542 = vmatprep.subr.mxu0 0.0
  %543 = vmatpush1.msra.mxu0 0.0
  %544 = vmatprep.subr.mxu0 0.0
  %545 = vmatpush1.msra.mxu0 0.0
  %546 = vmatprep.subr.mxu0 0.0
  %547 = vmatpush1.msra.mxu0 %v527
  %548 = vmatprep.subr.mxu0 0.0
  %549 = vmatpush1.msra.mxu0 %v526
  %550 = vmatprep.subr.mxu0 0.0
  %551 = vmatpush1.msra.mxu0 %v525
  %552 = vmatprep.subr.mxu0 0.0
  %553 = vmatpush1.msra.mxu0 %v524
  %554 = vmatprep.subr.mxu0 0.0
  %555 = vmatpush1.msra.mxu0 %v523
  %556 = vmatprep.subr.mxu0 0.0
  %557 = vmatpush1.msra.mxu0 %v522
  %558 = vmatprep.subr.mxu0 0.0
  %559 = vmatpush1.msra.mxu0 %v521
  %560 = vmatprep.subr.mxu0 0.0
  %561 = vmatpush1.msra.mxu0 %v520
  %562 = vmatprep.subr.mxu0 0.0
  %563 = vmatpush1.msra.mxu0 %v519
  %564 = vmatprep.subr.mxu0 0.0
  %565 = vmatpush1.msra.mxu0 %v518
  %566 = vmatprep.subr.mxu0 0.0
  %567 = vmatpush1.msra.mxu0 %v517
  %568 = vmatprep.subr.mxu0 0.0
  %569 = vmatpush1.msra.mxu0 %v516
  %570 = vmatprep.subr.mxu0 0.0
  %571 = vmatpush1.msra.mxu0 %v515
  %572 = vmatprep.subr.mxu0 0.0
  %573 = vmatpush1.msra.mxu0 %v514
  %574 = vmatprep.subr.mxu0 0.0
  %575 = vmatpush2.msra.mxu0 0.0
  %576 = vmatprep.subr.mxu0 0.0
  %577 = vmatpush2.msra.mxu0 0.0
  %578 = vmatprep.subr.mxu0 0.0
  %579 = vmatpush2.msra.mxu0 0.0
  %580 = vmatprep.subr.mxu0 0.0
  %581 = vmatpush2.msra.mxu0 0.0
  %582 = vmatprep.subr.mxu0 0.0
  %583 = vmatpush2.msra.mxu0 0.0
  %584 = vmatprep.subr.mxu0 0.0
  %585 = vmatpush2.msra.mxu0 0.0
  %586 = vmatprep.subr.mxu0 0.0
  %587 = vmatpush2.msra.mxu0 0.0
  %588 = vmatprep.subr.mxu0 0.0
  %589 = vmatpush2.msra.mxu0 0.0
  %590 = vmatprep.subr.mxu0 0.0
  %591 = vmatpush2.msra.mxu0 0.0
  %592 = vmatprep.subr.mxu0 0.0
  %593 = vmatpush2.msra.mxu0 0.0
  %594 = vmatprep.subr.mxu0 0.0
  %595 = vmatpush2.msra.mxu0 0.0
  %596 = vmatprep.subr.mxu0 0.0
  %597 = vmatpush2.msra.mxu0 0.0
  %598 = vmatprep.subr.mxu0 0.0
  %599 = vmatpush2.msra.mxu0 0.0
  %600 = vmatprep.subr.mxu0 0.0
  %601 = vmatpush2.msra.mxu0 0.0
  %602 = vmatprep.subr.mxu0 0.0
  %603 = vmatpush2.msra.mxu0 0.0
  %604 = vmatprep.subr.mxu0 0.0
  %605 = vmatpush2.msra.mxu0 0.0
  %606 = vmatprep.mubr.f32.mxu0 0.0
  %607 = vmatmul.mubr.f32.gmra.mxu0 %v537
  %v608 = vpop.f32.mrf.mxu0
  %v609 = vadd.f32 %v534, %v608
  %v610 = vpop.f32.mrf.mxu0
  %611 = vmatprep.mubr.f32.mxu0 0.0
  %612 = vmatmul.mubr.f32.gmra.mxu0 %v540
  %v613 = vpop.f32.mrf.mxu0
  %v614 = vadd.f32 %v534, %v613
  %v615 = vpop.f32.mrf.mxu0
  %616 = vdwg.mxu0
  %v617 = vld [vmem:[%s0] sm:$0xff]
  %v618 = vlaneseq
  %v619 = vand.u32 %v618, 127
  %620 = vset.pattern.permute.xlu0 0
  %621 = vperm.xlu0 %620, %v617
  %v622 = vpop.permute.xlu0 %621
  %vm623 = vcmp.eq.s32.totalorder %v619, %v622
  %v624 = vsel %vm623, 1.0, 0.0
  %625 = vset.pattern.permute.xlu0 2
  %626 = vperm.xlu0 %625, %v617
  %v627 = vpop.permute.xlu0 %626
  %vm628 = vcmp.eq.s32.totalorder %v619, %v627
  %v629 = vsel %vm628, 1.0, 0.0
  %630 = vset.pattern.permute.xlu0 1
  %631 = vperm.xlu0 %630, %v617
  %v632 = vpop.permute.xlu0 %631
  %vm633 = vcmp.eq.s32.totalorder %v619, %v632
  %v634 = vsel %vm633, 1.0, 0.0
  %v636 = vsel %vm137, %v624, 0
  %638 = vmatprep.subr.mxu0 0.0
  %639 = vmatpush1.msra.mxu0 0.0
  %640 = vmatprep.subr.mxu0 0.0
  %641 = vmatpush1.msra.mxu0 0.0
  %642 = vmatprep.subr.mxu0 0.0
  %643 = vmatpush1.msra.mxu0 0.0
  %644 = vmatprep.subr.mxu0 0.0
  %645 = vmatpush1.msra.mxu0 0.0
  %646 = vmatprep.subr.mxu0 0.0
  %647 = vmatpush1.msra.mxu0 0.0
  %648 = vmatprep.subr.mxu0 0.0
  %649 = vmatpush1.msra.mxu0 0.0
  %650 = vmatprep.subr.mxu0 0.0
  %651 = vmatpush1.msra.mxu0 0.0
  %652 = vmatprep.subr.mxu0 0.0
  %653 = vmatpush1.msra.mxu0 0.0
  %654 = vmatprep.subr.mxu0 0.0
  %655 = vmatpush1.msra.mxu0 0.0
  %656 = vmatprep.subr.mxu0 0.0
  %657 = vmatpush1.msra.mxu0 0.0
  %658 = vmatprep.subr.mxu0 0.0
  %659 = vmatpush1.msra.mxu0 0.0
  %660 = vmatprep.subr.mxu0 0.0
  %661 = vmatpush1.msra.mxu0 0.0
  %662 = vmatprep.subr.mxu0 0.0
  %663 = vmatpush1.msra.mxu0 0.0
  %664 = vmatprep.subr.mxu0 0.0
  %665 = vmatpush1.msra.mxu0 0.0
  %666 = vmatprep.subr.mxu0 0.0
  %667 = vmatpush1.msra.mxu0 %v614
  %668 = vmatprep.subr.mxu0 0.0
  %669 = vmatpush1.msra.mxu0 %v609
  %670 = vmatprep.subr.mxu0 0.0
  %671 = vmatpush2.msra.mxu0 0.0
  %672 = vmatprep.subr.mxu0 0.0
  %673 = vmatpush2.msra.mxu0 0.0
  %674 = vmatprep.subr.mxu0 0.0
  %675 = vmatpush2.msra.mxu0 0.0
  %676 = vmatprep.subr.mxu0 0.0
  %677 = vmatpush2.msra.mxu0 0.0
  %678 = vmatprep.subr.mxu0 0.0
  %679 = vmatpush2.msra.mxu0 0.0
  %680 = vmatprep.subr.mxu0 0.0
  %681 = vmatpush2.msra.mxu0 0.0
  %682 = vmatprep.subr.mxu0 0.0
  %683 = vmatpush2.msra.mxu0 0.0
  %684 = vmatprep.subr.mxu0 0.0
  %685 = vmatpush2.msra.mxu0 0.0
  %686 = vmatprep.subr.mxu0 0.0
  %687 = vmatpush2.msra.mxu0 0.0
  %688 = vmatprep.subr.mxu0 0.0
  %689 = vmatpush2.msra.mxu0 0.0
  %690 = vmatprep.subr.mxu0 0.0
  %691 = vmatpush2.msra.mxu0 0.0
  %692 = vmatprep.subr.mxu0 0.0
  %693 = vmatpush2.msra.mxu0 0.0
  %694 = vmatprep.subr.mxu0 0.0
  %695 = vmatpush2.msra.mxu0 0.0
  %696 = vmatprep.subr.mxu0 0.0
  %697 = vmatpush2.msra.mxu0 0.0
  %698 = vmatprep.subr.mxu0 0.0
  %699 = vmatpush2.msra.mxu0 0.0
  %700 = vmatprep.subr.mxu0 0.0
  %701 = vmatpush2.msra.mxu0 0.0
  %702 = vmatprep.mubr.f32.mxu0 0.0
  %703 = vmatmul.mubr.f32.gmra.mxu0 %v636
  %v704 = vpop.f32.mrf.mxu0
  %v705 = vadd.f32 0.0, %v704
  %v706 = vpop.f32.mrf.mxu0
  %707 = vdwg.mxu0
  %v709 = vsel %vm137, %v629, 0
  %711 = vmatprep.subr.mxu0 0.0
  %712 = vmatpush1.msra.mxu0 0.0
  %713 = vmatprep.subr.mxu0 0.0
  %714 = vmatpush1.msra.mxu0 0.0
  %715 = vmatprep.subr.mxu0 0.0
  %716 = vmatpush1.msra.mxu0 0.0
  %717 = vmatprep.subr.mxu0 0.0
  %718 = vmatpush1.msra.mxu0 0.0
  %719 = vmatprep.subr.mxu0 0.0
  %720 = vmatpush1.msra.mxu0 0.0
  %721 = vmatprep.subr.mxu0 0.0
  %722 = vmatpush1.msra.mxu0 0.0
  %723 = vmatprep.subr.mxu0 0.0
  %724 = vmatpush1.msra.mxu0 0.0
  %725 = vmatprep.subr.mxu0 0.0
  %726 = vmatpush1.msra.mxu0 0.0
  %727 = vmatprep.subr.mxu0 0.0
  %728 = vmatpush1.msra.mxu0 0.0
  %729 = vmatprep.subr.mxu0 0.0
  %730 = vmatpush1.msra.mxu0 0.0
  %731 = vmatprep.subr.mxu0 0.0
  %732 = vmatpush1.msra.mxu0 0.0
  %733 = vmatprep.subr.mxu0 0.0
  %734 = vmatpush1.msra.mxu0 0.0
  %735 = vmatprep.subr.mxu0 0.0
  %736 = vmatpush1.msra.mxu0 0.0
  %737 = vmatprep.subr.mxu0 0.0
  %738 = vmatpush1.msra.mxu0 0.0
  %739 = vmatprep.subr.mxu0 0.0
  %740 = vmatpush1.msra.mxu0 %v614
  %741 = vmatprep.subr.mxu0 0.0
  %742 = vmatpush1.msra.mxu0 %v609
  %743 = vmatprep.subr.mxu0 0.0
  %744 = vmatpush2.msra.mxu0 0.0
  %745 = vmatprep.subr.mxu0 0.0
  %746 = vmatpush2.msra.mxu0 0.0
  %747 = vmatprep.subr.mxu0 0.0
  %748 = vmatpush2.msra.mxu0 0.0
  %749 = vmatprep.subr.mxu0 0.0
  %750 = vmatpush2.msra.mxu0 0.0
  %751 = vmatprep.subr.mxu0 0.0
  %752 = vmatpush2.msra.mxu0 0.0
  %753 = vmatprep.subr.mxu0 0.0
  %754 = vmatpush2.msra.mxu0 0.0
  %755 = vmatprep.subr.mxu0 0.0
  %756 = vmatpush2.msra.mxu0 0.0
  %757 = vmatprep.subr.mxu0 0.0
  %758 = vmatpush2.msra.mxu0 0.0
  %759 = vmatprep.subr.mxu0 0.0
  %760 = vmatpush2.msra.mxu0 0.0
  %761 = vmatprep.subr.mxu0 0.0
  %762 = vmatpush2.msra.mxu0 0.0
  %763 = vmatprep.subr.mxu0 0.0
  %764 = vmatpush2.msra.mxu0 0.0
  %765 = vmatprep.subr.mxu0 0.0
  %766 = vmatpush2.msra.mxu0 0.0
  %767 = vmatprep.subr.mxu0 0.0
  %768 = vmatpush2.msra.mxu0 0.0
  %769 = vmatprep.subr.mxu0 0.0
  %770 = vmatpush2.msra.mxu0 0.0
  %771 = vmatprep.subr.mxu0 0.0
  %772 = vmatpush2.msra.mxu0 0.0
  %773 = vmatprep.subr.mxu0 0.0
  %774 = vmatpush2.msra.mxu0 0.0
  %775 = vmatprep.mubr.f32.mxu0 0.0
  %776 = vmatmul.mubr.f32.gmra.mxu0 %v709
  %v777 = vpop.f32.mrf.mxu0
  %v778 = vadd.f32 0.0, %v777
  %v779 = vpop.f32.mrf.mxu0
  %780 = vdwg.mxu0
  %v781 = vld [vmem:[%s2] sm:$0xff]
  %vm782 = vcmask 64512
  %v784 = vsel %vm782, %v634, 0
  %786 = vmatprep.subr.mxu0 0.0
  %787 = vmatpush1.msra.mxu0 0.0
  %788 = vmatprep.subr.mxu0 0.0
  %789 = vmatpush1.msra.mxu0 0.0
  %790 = vmatprep.subr.mxu0 0.0
  %791 = vmatpush1.msra.mxu0 0.0
  %792 = vmatprep.subr.mxu0 0.0
  %793 = vmatpush1.msra.mxu0 0.0
  %794 = vmatprep.subr.mxu0 0.0
  %795 = vmatpush1.msra.mxu0 0.0
  %796 = vmatprep.subr.mxu0 0.0
  %797 = vmatpush1.msra.mxu0 0.0
  %798 = vmatprep.subr.mxu0 0.0
  %799 = vmatpush1.msra.mxu0 0.0
  %800 = vmatprep.subr.mxu0 0.0
  %801 = vmatpush1.msra.mxu0 0.0
  %802 = vmatprep.subr.mxu0 0.0
  %803 = vmatpush1.msra.mxu0 0.0
  %804 = vmatprep.subr.mxu0 0.0
  %805 = vmatpush1.msra.mxu0 0.0
  %806 = vmatprep.subr.mxu0 0.0
  %807 = vmatpush1.msra.mxu0 0.0
  %808 = vmatprep.subr.mxu0 0.0
  %809 = vmatpush1.msra.mxu0 0.0
  %810 = vmatprep.subr.mxu0 0.0
  %811 = vmatpush1.msra.mxu0 0.0
  %812 = vmatprep.subr.mxu0 0.0
  %813 = vmatpush1.msra.mxu0 0.0
  %814 = vmatprep.subr.mxu0 0.0
  %815 = vmatpush1.msra.mxu0 0.0
  %816 = vmatprep.subr.mxu0 0.0
  %817 = vmatpush1.msra.mxu0 %v781
  %818 = vmatprep.subr.mxu0 0.0
  %819 = vmatpush2.msra.mxu0 0.0
  %820 = vmatprep.subr.mxu0 0.0
  %821 = vmatpush2.msra.mxu0 0.0
  %822 = vmatprep.subr.mxu0 0.0
  %823 = vmatpush2.msra.mxu0 0.0
  %824 = vmatprep.subr.mxu0 0.0
  %825 = vmatpush2.msra.mxu0 0.0
  %826 = vmatprep.subr.mxu0 0.0
  %827 = vmatpush2.msra.mxu0 0.0
  %828 = vmatprep.subr.mxu0 0.0
  %829 = vmatpush2.msra.mxu0 0.0
  %830 = vmatprep.subr.mxu0 0.0
  %831 = vmatpush2.msra.mxu0 0.0
  %832 = vmatprep.subr.mxu0 0.0
  %833 = vmatpush2.msra.mxu0 0.0
  %834 = vmatprep.subr.mxu0 0.0
  %835 = vmatpush2.msra.mxu0 0.0
  %836 = vmatprep.subr.mxu0 0.0
  %837 = vmatpush2.msra.mxu0 0.0
  %838 = vmatprep.subr.mxu0 0.0
  %839 = vmatpush2.msra.mxu0 0.0
  %840 = vmatprep.subr.mxu0 0.0
  %841 = vmatpush2.msra.mxu0 0.0
  %842 = vmatprep.subr.mxu0 0.0
  %843 = vmatpush2.msra.mxu0 0.0
  %844 = vmatprep.subr.mxu0 0.0
  %845 = vmatpush2.msra.mxu0 0.0
  %846 = vmatprep.subr.mxu0 0.0
  %847 = vmatpush2.msra.mxu0 0.0
  %848 = vmatprep.subr.mxu0 0.0
  %849 = vmatpush2.msra.mxu0 0.0
  %850 = vmatprep.mubr.f32.mxu0 0.0
  %851 = vmatmul.mubr.f32.gmra.mxu0 %v784
  %v852 = vpop.f32.mrf.mxu0
  %v853 = vadd.f32 0.0, %v852
  %v854 = vpop.f32.mrf.mxu0
  %855 = vdwg.mxu0
  %v856 = vld [vmem:[%s8] sm:$0xff]
  %v857 = vld [vmem:[%s8 + $0x8] sm:$0xff]
  %v858 = vld [vmem:[%s9] sm:$0x1]
  %v860 = vsel %vm137, %v705, 0
  %862 = vmatprep.subr.mxu0 0.0
  %863 = vmatpush1.msra.mxu0 0.0
  %864 = vmatprep.subr.mxu0 0.0
  %865 = vmatpush1.msra.mxu0 0.0
  %866 = vmatprep.subr.mxu0 0.0
  %867 = vmatpush1.msra.mxu0 0.0
  %868 = vmatprep.subr.mxu0 0.0
  %869 = vmatpush1.msra.mxu0 0.0
  %870 = vmatprep.subr.mxu0 0.0
  %871 = vmatpush1.msra.mxu0 0.0
  %872 = vmatprep.subr.mxu0 0.0
  %873 = vmatpush1.msra.mxu0 0.0
  %874 = vmatprep.subr.mxu0 0.0
  %875 = vmatpush1.msra.mxu0 0.0
  %876 = vmatprep.subr.mxu0 0.0
  %877 = vmatpush1.msra.mxu0 0.0
  %878 = vmatprep.subr.mxu0 0.0
  %879 = vmatpush1.msra.mxu0 0.0
  %880 = vmatprep.subr.mxu0 0.0
  %881 = vmatpush1.msra.mxu0 0.0
  %882 = vmatprep.subr.mxu0 0.0
  %883 = vmatpush1.msra.mxu0 0.0
  %884 = vmatprep.subr.mxu0 0.0
  %885 = vmatpush1.msra.mxu0 0.0
  %886 = vmatprep.subr.mxu0 0.0
  %887 = vmatpush1.msra.mxu0 0.0
  %888 = vmatprep.subr.mxu0 0.0
  %889 = vmatpush1.msra.mxu0 0.0
  %890 = vmatprep.subr.mxu0 0.0
  %891 = vmatpush1.msra.mxu0 %v857
  %892 = vmatprep.subr.mxu0 0.0
  %893 = vmatpush1.msra.mxu0 %v856
  %894 = vmatprep.subr.mxu0 0.0
  %895 = vmatpush2.msra.mxu0 0.0
  %896 = vmatprep.subr.mxu0 0.0
  %897 = vmatpush2.msra.mxu0 0.0
  %898 = vmatprep.subr.mxu0 0.0
  %899 = vmatpush2.msra.mxu0 0.0
  %900 = vmatprep.subr.mxu0 0.0
  %901 = vmatpush2.msra.mxu0 0.0
  %902 = vmatprep.subr.mxu0 0.0
  %903 = vmatpush2.msra.mxu0 0.0
  %904 = vmatprep.subr.mxu0 0.0
  %905 = vmatpush2.msra.mxu0 0.0
  %906 = vmatprep.subr.mxu0 0.0
  %907 = vmatpush2.msra.mxu0 0.0
  %908 = vmatprep.subr.mxu0 0.0
  %909 = vmatpush2.msra.mxu0 0.0
  %910 = vmatprep.subr.mxu0 0.0
  %911 = vmatpush2.msra.mxu0 0.0
  %912 = vmatprep.subr.mxu0 0.0
  %913 = vmatpush2.msra.mxu0 0.0
  %914 = vmatprep.subr.mxu0 0.0
  %915 = vmatpush2.msra.mxu0 0.0
  %916 = vmatprep.subr.mxu0 0.0
  %917 = vmatpush2.msra.mxu0 0.0
  %918 = vmatprep.subr.mxu0 0.0
  %919 = vmatpush2.msra.mxu0 0.0
  %920 = vmatprep.subr.mxu0 0.0
  %921 = vmatpush2.msra.mxu0 0.0
  %922 = vmatprep.subr.mxu0 0.0
  %923 = vmatpush2.msra.mxu0 0.0
  %924 = vmatprep.subr.mxu0 0.0
  %925 = vmatpush2.msra.mxu0 0.0
  %926 = vmatprep.mubr.f32.mxu0 0.0
  %927 = vmatmul.mubr.f32.gmra.mxu0 %v860
  %v928 = vpop.f32.mrf.mxu0
  %v929 = vadd.f32 0.0, %v928
  %v930 = vpop.f32.mrf.mxu0
  %931 = vdwg.mxu0
  %932 = vmatprep.subr.mxu0 0.0
  %933 = vmatpush1.msra.mxu0 0.0
  %934 = vmatprep.subr.mxu0 0.0
  %935 = vmatpush1.msra.mxu0 0.0
  %936 = vmatprep.subr.mxu0 0.0
  %937 = vmatpush1.msra.mxu0 0.0
  %938 = vmatprep.subr.mxu0 0.0
  %939 = vmatpush1.msra.mxu0 0.0
  %940 = vmatprep.subr.mxu0 0.0
  %941 = vmatpush1.msra.mxu0 0.0
  %942 = vmatprep.subr.mxu0 0.0
  %943 = vmatpush1.msra.mxu0 0.0
  %944 = vmatprep.subr.mxu0 0.0
  %945 = vmatpush1.msra.mxu0 0.0
  %946 = vmatprep.subr.mxu0 0.0
  %947 = vmatpush1.msra.mxu0 0.0
  %948 = vmatprep.subr.mxu0 0.0
  %949 = vmatpush1.msra.mxu0 0.0
  %950 = vmatprep.subr.mxu0 0.0
  %951 = vmatpush1.msra.mxu0 0.0
  %952 = vmatprep.subr.mxu0 0.0
  %953 = vmatpush1.msra.mxu0 0.0
  %954 = vmatprep.subr.mxu0 0.0
  %955 = vmatpush1.msra.mxu0 0.0
  %956 = vmatprep.subr.mxu0 0.0
  %957 = vmatpush1.msra.mxu0 0.0
  %958 = vmatprep.subr.mxu0 0.0
  %959 = vmatpush1.msra.mxu0 0.0
  %960 = vmatprep.subr.mxu0 0.0
  %961 = vmatpush1.msra.mxu0 %v36
  %962 = vmatprep.subr.mxu0 0.0
  %963 = vmatpush1.msra.mxu0 %v35
  %964 = vmatprep.subr.mxu0 0.0
  %965 = vmatpush2.msra.mxu0 0.0
  %966 = vmatprep.subr.mxu0 0.0
  %967 = vmatpush2.msra.mxu0 0.0
  %968 = vmatprep.subr.mxu0 0.0
  %969 = vmatpush2.msra.mxu0 0.0
  %970 = vmatprep.subr.mxu0 0.0
  %971 = vmatpush2.msra.mxu0 0.0
  %972 = vmatprep.subr.mxu0 0.0
  %973 = vmatpush2.msra.mxu0 0.0
  %974 = vmatprep.subr.mxu0 0.0
  %975 = vmatpush2.msra.mxu0 0.0
  %976 = vmatprep.subr.mxu0 0.0
  %977 = vmatpush2.msra.mxu0 0.0
  %978 = vmatprep.subr.mxu0 0.0
  %979 = vmatpush2.msra.mxu0 0.0
  %980 = vmatprep.subr.mxu0 0.0
  %981 = vmatpush2.msra.mxu0 0.0
  %982 = vmatprep.subr.mxu0 0.0
  %983 = vmatpush2.msra.mxu0 0.0
  %984 = vmatprep.subr.mxu0 0.0
  %985 = vmatpush2.msra.mxu0 0.0
  %986 = vmatprep.subr.mxu0 0.0
  %987 = vmatpush2.msra.mxu0 0.0
  %988 = vmatprep.subr.mxu0 0.0
  %989 = vmatpush2.msra.mxu0 0.0
  %990 = vmatprep.subr.mxu0 0.0
  %991 = vmatpush2.msra.mxu0 0.0
  %992 = vmatprep.subr.mxu0 0.0
  %993 = vmatpush2.msra.mxu0 0.0
  %994 = vmatprep.subr.mxu0 0.0
  %995 = vmatpush2.msra.mxu0 0.0
  %996 = vmatprep.mubr.f32.mxu0 0.0
  %997 = vmatmul.mubr.f32.gmra.mxu0 %v636
  %v998 = vpop.f32.mrf.mxu0
  %v999 = vadd.f32 %v929, %v998
  %v1000 = vpop.f32.mrf.mxu0
  %1001 = vdwg.mxu0
  %v1003 = vlaneseq
  %v1004 = vshrl.u32 %v1003, 7
  %v1005 = vsub.s32 0, %v1004
  %v1006 = vrot.slane %v858, %v1005
  %v1008 = vadd.f32 %v999, %v1006
  %v1010 = vsel %vm137, %v778, 0
  %1012 = vmatprep.subr.mxu0 0.0
  %1013 = vmatpush1.msra.mxu0 0.0
  %1014 = vmatprep.subr.mxu0 0.0
  %1015 = vmatpush1.msra.mxu0 0.0
  %1016 = vmatprep.subr.mxu0 0.0
  %1017 = vmatpush1.msra.mxu0 0.0
  %1018 = vmatprep.subr.mxu0 0.0
  %1019 = vmatpush1.msra.mxu0 0.0
  %1020 = vmatprep.subr.mxu0 0.0
  %1021 = vmatpush1.msra.mxu0 0.0
  %1022 = vmatprep.subr.mxu0 0.0
  %1023 = vmatpush1.msra.mxu0 0.0
  %1024 = vmatprep.subr.mxu0 0.0
  %1025 = vmatpush1.msra.mxu0 0.0
  %1026 = vmatprep.subr.mxu0 0.0
  %1027 = vmatpush1.msra.mxu0 0.0
  %1028 = vmatprep.subr.mxu0 0.0
  %1029 = vmatpush1.msra.mxu0 0.0
  %1030 = vmatprep.subr.mxu0 0.0
  %1031 = vmatpush1.msra.mxu0 0.0
  %1032 = vmatprep.subr.mxu0 0.0
  %1033 = vmatpush1.msra.mxu0 0.0
  %1034 = vmatprep.subr.mxu0 0.0
  %1035 = vmatpush1.msra.mxu0 0.0
  %1036 = vmatprep.subr.mxu0 0.0
  %1037 = vmatpush1.msra.mxu0 0.0
  %1038 = vmatprep.subr.mxu0 0.0
  %1039 = vmatpush1.msra.mxu0 0.0
  %1040 = vmatprep.subr.mxu0 0.0
  %1041 = vmatpush1.msra.mxu0 %v857
  %1042 = vmatprep.subr.mxu0 0.0
  %1043 = vmatpush1.msra.mxu0 %v856
  %1044 = vmatprep.subr.mxu0 0.0
  %1045 = vmatpush2.msra.mxu0 0.0
  %1046 = vmatprep.subr.mxu0 0.0
  %1047 = vmatpush2.msra.mxu0 0.0
  %1048 = vmatprep.subr.mxu0 0.0
  %1049 = vmatpush2.msra.mxu0 0.0
  %1050 = vmatprep.subr.mxu0 0.0
  %1051 = vmatpush2.msra.mxu0 0.0
  %1052 = vmatprep.subr.mxu0 0.0
  %1053 = vmatpush2.msra.mxu0 0.0
  %1054 = vmatprep.subr.mxu0 0.0
  %1055 = vmatpush2.msra.mxu0 0.0
  %1056 = vmatprep.subr.mxu0 0.0
  %1057 = vmatpush2.msra.mxu0 0.0
  %1058 = vmatprep.subr.mxu0 0.0
  %1059 = vmatpush2.msra.mxu0 0.0
  %1060 = vmatprep.subr.mxu0 0.0
  %1061 = vmatpush2.msra.mxu0 0.0
  %1062 = vmatprep.subr.mxu0 0.0
  %1063 = vmatpush2.msra.mxu0 0.0
  %1064 = vmatprep.subr.mxu0 0.0
  %1065 = vmatpush2.msra.mxu0 0.0
  %1066 = vmatprep.subr.mxu0 0.0
  %1067 = vmatpush2.msra.mxu0 0.0
  %1068 = vmatprep.subr.mxu0 0.0
  %1069 = vmatpush2.msra.mxu0 0.0
  %1070 = vmatprep.subr.mxu0 0.0
  %1071 = vmatpush2.msra.mxu0 0.0
  %1072 = vmatprep.subr.mxu0 0.0
  %1073 = vmatpush2.msra.mxu0 0.0
  %1074 = vmatprep.subr.mxu0 0.0
  %1075 = vmatpush2.msra.mxu0 0.0
  %1076 = vmatprep.mubr.f32.mxu0 0.0
  %1077 = vmatmul.mubr.f32.gmra.mxu0 %v1010
  %v1078 = vpop.f32.mrf.mxu0
  %v1079 = vadd.f32 0.0, %v1078
  %v1080 = vpop.f32.mrf.mxu0
  %1081 = vdwg.mxu0
  %1082 = vmatprep.subr.mxu0 0.0
  %1083 = vmatpush1.msra.mxu0 0.0
  %1084 = vmatprep.subr.mxu0 0.0
  %1085 = vmatpush1.msra.mxu0 0.0
  %1086 = vmatprep.subr.mxu0 0.0
  %1087 = vmatpush1.msra.mxu0 0.0
  %1088 = vmatprep.subr.mxu0 0.0
  %1089 = vmatpush1.msra.mxu0 0.0
  %1090 = vmatprep.subr.mxu0 0.0
  %1091 = vmatpush1.msra.mxu0 0.0
  %1092 = vmatprep.subr.mxu0 0.0
  %1093 = vmatpush1.msra.mxu0 0.0
  %1094 = vmatprep.subr.mxu0 0.0
  %1095 = vmatpush1.msra.mxu0 0.0
  %1096 = vmatprep.subr.mxu0 0.0
  %1097 = vmatpush1.msra.mxu0 0.0
  %1098 = vmatprep.subr.mxu0 0.0
  %1099 = vmatpush1.msra.mxu0 0.0
  %1100 = vmatprep.subr.mxu0 0.0
  %1101 = vmatpush1.msra.mxu0 0.0
  %1102 = vmatprep.subr.mxu0 0.0
  %1103 = vmatpush1.msra.mxu0 0.0
  %1104 = vmatprep.subr.mxu0 0.0
  %1105 = vmatpush1.msra.mxu0 0.0
  %1106 = vmatprep.subr.mxu0 0.0
  %1107 = vmatpush1.msra.mxu0 0.0
  %1108 = vmatprep.subr.mxu0 0.0
  %1109 = vmatpush1.msra.mxu0 0.0
  %1110 = vmatprep.subr.mxu0 0.0
  %1111 = vmatpush1.msra.mxu0 %v36
  %1112 = vmatprep.subr.mxu0 0.0
  %1113 = vmatpush1.msra.mxu0 %v35
  %1114 = vmatprep.subr.mxu0 0.0
  %1115 = vmatpush2.msra.mxu0 0.0
  %1116 = vmatprep.subr.mxu0 0.0
  %1117 = vmatpush2.msra.mxu0 0.0
  %1118 = vmatprep.subr.mxu0 0.0
  %1119 = vmatpush2.msra.mxu0 0.0
  %1120 = vmatprep.subr.mxu0 0.0
  %1121 = vmatpush2.msra.mxu0 0.0
  %1122 = vmatprep.subr.mxu0 0.0
  %1123 = vmatpush2.msra.mxu0 0.0
  %1124 = vmatprep.subr.mxu0 0.0
  %1125 = vmatpush2.msra.mxu0 0.0
  %1126 = vmatprep.subr.mxu0 0.0
  %1127 = vmatpush2.msra.mxu0 0.0
  %1128 = vmatprep.subr.mxu0 0.0
  %1129 = vmatpush2.msra.mxu0 0.0
  %1130 = vmatprep.subr.mxu0 0.0
  %1131 = vmatpush2.msra.mxu0 0.0
  %1132 = vmatprep.subr.mxu0 0.0
  %1133 = vmatpush2.msra.mxu0 0.0
  %1134 = vmatprep.subr.mxu0 0.0
  %1135 = vmatpush2.msra.mxu0 0.0
  %1136 = vmatprep.subr.mxu0 0.0
  %1137 = vmatpush2.msra.mxu0 0.0
  %1138 = vmatprep.subr.mxu0 0.0
  %1139 = vmatpush2.msra.mxu0 0.0
  %1140 = vmatprep.subr.mxu0 0.0
  %1141 = vmatpush2.msra.mxu0 0.0
  %1142 = vmatprep.subr.mxu0 0.0
  %1143 = vmatpush2.msra.mxu0 0.0
  %1144 = vmatprep.subr.mxu0 0.0
  %1145 = vmatpush2.msra.mxu0 0.0
  %1146 = vmatprep.mubr.f32.mxu0 0.0
  %1147 = vmatmul.mubr.f32.gmra.mxu0 %v709
  %v1148 = vpop.f32.mrf.mxu0
  %v1149 = vadd.f32 %v1079, %v1148
  %v1150 = vpop.f32.mrf.mxu0
  %1151 = vdwg.mxu0
  %v1152 = vadd.f32 %v1149, %v1006
  %v1153 = vmul.f32 %v1008, %v853
  %v1154 = vmul.f32 %v1153, %v1152
  %1155 = vadd.xlane.f32.xlu0 %v1154
  %v1156 = vpop.xlane.xlu0 %1155
  %vm1157 = vcmask 7168
  %1158 = vst.msk [vmem:[%s10] sm:$0xff] %vm1157, %v1156
  // Predicated region
  $region42: #{tpu_custom_call.1} parent=0 // pred_check
    _
  $region43: #{tpu_custom_call.1} parent=0 // pred_check_branch
    %1160 = sbr.rel (0) target = $region45
  $region44: #{tpu_custom_call.1} parent=0 // pred_region
    _
  $region45: #{tpu_custom_call.1} parent=0 // pred_fallthru
    _
  // Predicated region
  $region46: #{tpu_custom_call.1} parent=0 // pred_check
    _
  $region47: #{tpu_custom_call.1} parent=0 // pred_check_branch
    %1162 = sbr.rel (0) target = $region49
  $region48: #{tpu_custom_call.1} parent=0 // pred_region
    _
  $region49: #{tpu_custom_call.1} parent=0 // pred_fallthru
    _

</llo_original>
